<compile_context>
chip_gen: v7x
topology: tpu7x:2x2x1
jax: 0.10.0
libtpu: 0.0.40
codegen_flags: <defaults>
</compile_context>

<pallas_src>
import jax
import jax.numpy as jnp
from jax.experimental import pallas as pl
from jax.experimental.pallas import tpu as pltpu

# ----------------------------- config -----------------------------
B, S, D, H, V, L = 2, 8, 32, 4, 64, 2   # batch, seq, hidden, heads, vocab, layers
DH = D // H                              # head dim
DFF = 4 * D                              # MLP hidden
BS = B * S                               # flattened token axis
VP = 128                                 # vocab padded to lane width
HB = H * BS                              # packed (head, key) axis

assert (S & (S - 1)) == 0 and (BS & (BS - 1)) == 0 and (DH & (DH - 1)) == 0
LOG2_S = S.bit_length() - 1
LOG2_BS = BS.bit_length() - 1
LOG2_DH = DH.bit_length() - 1

# ---------------- parameter-slab layout (rows x 128 lanes, f32) ----------------
R_WTE = 0                                   # (VP, D)  token embedding (rows V..VP-1 zero)
R_WPE = R_WTE + VP                          # (S, D)   position embedding
R_VEC = R_WPE + ((S + 7) // 8) * 8          # 1-row vectors (gains / biases)
NVEC = 2 + 8 * L                            # lnf_g, lnf_b + 8 vectors per layer
R_MAT = R_VEC + ((NVEC + 7) // 8) * 8       # per-layer weight matrices
LAYER_MAT = 3 * D + DFF                     # rows per layer: w_qkv(D)+w_o(D)+w_fc(D)+w_proj(DFF)
R_TOTAL = R_MAT + L * LAYER_MAT             # 608 rows -> ~311 KB f32
TOK_ROWS = ((BS + 1 + 7) // 8) * 8          # packed int inputs: ids/labels cols + mask row


# ---------------------- single fused forward kernel ----------------------
def _fused_forward_kernel(tok_ref, slab_ref, logits_ref, loss_ref):
    f32 = jnp.float32
    bf16 = jnp.bfloat16
    scale = 1.0 / (DH ** 0.5)

    # ---- packed token info: col0=ids, col1=shifted labels, row BS = key mask ----
    ids = tok_ref[0:BS, 0:1]                       # (BS, 1) int32
    labels = tok_ref[0:BS, 1:2]                    # (BS, 1) int32
    mask_key = tok_ref[BS:BS + 1, 0:BS]            # (1, BS) int32

    # ---- embeddings: one-hot matmul for tokens, tiled rows for positions ----
    wte_bf = slab_ref[R_WTE:R_WTE + VP, 0:D].astype(bf16)        # (VP, D), reused by LM head
    wpe = slab_ref[R_WPE:R_WPE + S, 0:D]                         # (S, D) f32

    vocab_iota = jax.lax.broadcasted_iota(jnp.int32, (BS, VP), 1)
    tok_onehot = (vocab_iota == ids).astype(f32).astype(bf16)    # (BS, VP)
    h = jnp.dot(tok_onehot, wte_bf, preferred_element_type=f32)  # (BS, D)
    h = h + jnp.concatenate([wpe] * B, axis=0)                   # pos emb = wpe tiled over batch

    # ---- additive causal + key-padding mask, built once, tiled across heads ----
    ri = jax.lax.broadcasted_iota(jnp.int32, (BS, BS), 0)
    ci = jax.lax.broadcasted_iota(jnp.int32, (BS, BS), 1)
    keep = ((ri >> LOG2_S) == (ci >> LOG2_S)) & (ci <= ri) & (mask_key > 0)
    addmask = jnp.where(keep, 0.0, -1e9).astype(f32)             # (BS, BS)
    addmask_t = jnp.concatenate([addmask] * H, axis=1)           # (BS, HB)

    # ---- block-diagonal placement mask: (key-slot head) == (column head) ----
    rj = jax.lax.broadcasted_iota(jnp.int32, (HB, D), 0)
    cd = jax.lax.broadcasted_iota(jnp.int32, (HB, D), 1)
    kvm = ((rj >> LOG2_BS) == (cd >> LOG2_DH)).astype(f32)       # (HB, D)
    kvm_bf = kvm.astype(bf16)

    def layer_norm(x, g, b):
        mu = jnp.mean(x, axis=-1, keepdims=True)
        var = jnp.mean((x - mu) ** 2, axis=-1, keepdims=True)
        return (x - mu) * jax.lax.rsqrt(var + 1e-5) * g + b

    # --------------------------- transformer blocks ---------------------------
    for lidx in range(L):
        vb = R_VEC + 2 + 8 * lidx
        mb = R_MAT + LAYER_MAT * lidx
        ln1_g = slab_ref[vb + 0:vb + 1, 0:D]
        ln1_b = slab_ref[vb + 1:vb + 2, 0:D]
        b_qkv = slab_ref[vb + 2:vb + 3, 0:3 * D]
        b_o = slab_ref[vb + 3:vb + 4, 0:D]
        ln2_g = slab_ref[vb + 4:vb + 5, 0:D]
        ln2_b = slab_ref[vb + 5:vb + 6, 0:D]
        b_fc = slab_ref[vb + 6:vb + 7, 0:DFF]
        b_proj = slab_ref[vb + 7:vb + 8, 0:D]
        w_qkv = slab_ref[mb:mb + D, 0:3 * D].astype(bf16)                 # (D, 3D)
        w_o = slab_ref[mb + D:mb + 2 * D, 0:D].astype(bf16)               # (D, D)
        w_fc = slab_ref[mb + 2 * D:mb + 3 * D, 0:DFF].astype(bf16)        # (D, DFF)
        w_proj = slab_ref[mb + 3 * D:mb + 3 * D + DFF, 0:D].astype(bf16)  # (DFF, D)

        # ---- attention: LN -> fused QKV -> collapsed multi-head softmax ----
        x = layer_norm(h, ln1_g, ln1_b)
        qkv = jnp.dot(x.astype(bf16), w_qkv, preferred_element_type=f32) + b_qkv
        q = qkv[:, 0:D]
        k = qkv[:, D:2 * D]
        v = qkv[:, 2 * D:3 * D]
        # Block-diagonal K / V: row j holds key-token (j mod BS) restricted to
        # the columns of head (j // BS).  One matmul then yields ALL heads.
        kbig = (jnp.concatenate([k] * H, axis=0) * kvm).astype(bf16)      # (HB, D)
        vbig = (jnp.concatenate([v] * H, axis=0) * kvm).astype(bf16)      # (HB, D)

        s = jax.lax.dot_general(q.astype(bf16), kbig, (((1,), (1,)), ((), ())),
                                preferred_element_type=f32) * scale + addmask_t
        m = jnp.max(s, axis=-1, keepdims=True)                 # per-row shift (softmax-invariant)
        p = jnp.exp(s - m)                                     # (BS, HB) f32
        p_bf = p.astype(bf16)
        ctx = jnp.dot(p_bf, vbig, preferred_element_type=f32)  # unnormalized, head-concat layout
        den = jnp.dot(p_bf, kvm_bf, preferred_element_type=f32)  # per-head softmax denominators
        ctx = ctx * pl.reciprocal(jnp.maximum(den, 1e-30))
        h = h + jnp.dot(ctx.astype(bf16), w_o, preferred_element_type=f32) + b_o

        # ---- MLP: LN -> fc -> gelu_new -> proj -> residual ----
        x2 = layer_norm(h, ln2_g, ln2_b)
        ff = jnp.dot(x2.astype(bf16), w_fc, preferred_element_type=f32) + b_fc
        c0 = 0.7978845608028654  # sqrt(2/pi), tanh-approx GELU (GPT-2 gelu_new)
        ff = 0.5 * ff * (1.0 + jnp.tanh(c0 * (ff + 0.044715 * ff * ff * ff)))
        h = h + jnp.dot(ff.astype(bf16), w_proj, preferred_element_type=f32) + b_proj

    # ------------- final LN + tied LM head (lane-dense VP=128 logits) -------------
    lnf_g = slab_ref[R_VEC + 0:R_VEC + 1, 0:D]
    lnf_b = slab_ref[R_VEC + 1:R_VEC + 2, 0:D]
    hf = layer_norm(h, lnf_g, lnf_b)
    logits = jax.lax.dot_general(hf.astype(bf16), wte_bf, (((1,), (1,)), ((), ())),
                                 preferred_element_type=f32)   # (BS, VP)
    logits_ref[...] = logits

    # ------- HF causal-LM loss: shifted labels, ignore_index=-100, mean -------
    logits_m = jnp.where(vocab_iota >= V, -1e9, logits)        # exclude padded vocab cols
    m2 = jnp.max(logits_m, axis=-1, keepdims=True)
    lse = jnp.log(jnp.sum(jnp.exp(logits_m - m2), axis=-1, keepdims=True)) + m2
    tgt_onehot = (vocab_iota == labels).astype(f32)            # -100 matches nothing
    tgt = jnp.sum(logits * tgt_onehot, axis=-1, keepdims=True)
    valid = (labels != -100).astype(f32)
    num = jnp.sum((lse - tgt) * valid, axis=0, keepdims=True)  # (1, 1)
    cnt = jnp.sum(valid, axis=0, keepdims=True)                # (1, 1)
    loss_ref[...] = num * pl.reciprocal(cnt)


# ------------------------- parameter init & packing -------------------------
def init_params(key):
    ks = jax.random.split(key, 4 + 8 * L)
    ki = iter(ks)
    std = 0.02
    p = {
        "wte": jax.random.normal(next(ki), (V, D), jnp.float32) * std,
        "wpe": jax.random.normal(next(ki), (S, D), jnp.float32) * std,
        "lnf_g": jnp.ones((D,), jnp.float32),
        "lnf_b": jnp.zeros((D,), jnp.float32),
        "layers": [],
    }
    for _ in range(L):
        p["layers"].append({
            "ln1_g": jnp.ones((D,), jnp.float32),
            "ln1_b": jnp.zeros((D,), jnp.float32),
            "w_qkv": jax.random.normal(next(ki), (D, 3 * D), jnp.float32) * std,
            "b_qkv": jnp.zeros((3 * D,), jnp.float32),
            "w_o": jax.random.normal(next(ki), (D, D), jnp.float32) * std,
            "b_o": jnp.zeros((D,), jnp.float32),
            "ln2_g": jnp.ones((D,), jnp.float32),
            "ln2_b": jnp.zeros((D,), jnp.float32),
            "w_fc": jax.random.normal(next(ki), (D, DFF), jnp.float32) * std,
            "b_fc": jnp.zeros((DFF,), jnp.float32),
            "w_proj": jax.random.normal(next(ki), (DFF, D), jnp.float32) * std,
            "b_proj": jnp.zeros((D,), jnp.float32),
        })
    return p


def pack_params(params):
    """Pack all weights into one contiguous (R_TOTAL, 128) f32 slab (done once)."""
    slab = jnp.zeros((R_TOTAL, 128), jnp.float32)
    slab = slab.at[R_WTE:R_WTE + V, 0:D].set(params["wte"])        # rows V..VP-1 stay zero
    slab = slab.at[R_WPE:R_WPE + S, 0:D].set(params["wpe"])
    slab = slab.at[R_VEC + 0, 0:D].set(params["lnf_g"])
    slab = slab.at[R_VEC + 1, 0:D].set(params["lnf_b"])
    for l, lyr in enumerate(params["layers"]):
        vb = R_VEC + 2 + 8 * l
        mb = R_MAT + LAYER_MAT * l
        slab = slab.at[vb + 0, 0:D].set(lyr["ln1_g"])
        slab = slab.at[vb + 1, 0:D].set(lyr["ln1_b"])
        slab = slab.at[vb + 2, 0:3 * D].set(lyr["b_qkv"])
        slab = slab.at[vb + 3, 0:D].set(lyr["b_o"])
        slab = slab.at[vb + 4, 0:D].set(lyr["ln2_g"])
        slab = slab.at[vb + 5, 0:D].set(lyr["ln2_b"])
        slab = slab.at[vb + 6, 0:DFF].set(lyr["b_fc"])
        slab = slab.at[vb + 7, 0:D].set(lyr["b_proj"])
        slab = slab.at[mb:mb + D, 0:3 * D].set(lyr["w_qkv"])
        slab = slab.at[mb + D:mb + 2 * D, 0:D].set(lyr["w_o"])
        slab = slab.at[mb + 2 * D:mb + 3 * D, 0:DFF].set(lyr["w_fc"])
        slab = slab.at[mb + 3 * D:mb + 3 * D + DFF, 0:D].set(lyr["w_proj"])
    return slab


# --------------------------- model forward ------------------------
@jax.jit
def model_llm_forward(param_slab, input_ids, attention_mask, targets):
    """Returns (loss, logits) like HF `outputs.loss, outputs.logits`."""
    ids_flat = input_ids.reshape(BS).astype(jnp.int32)
    # HF label shift: position t scored against token t+1; last position of each
    # sequence gets ignore_index (-100) so it drops out of the mean.
    labels_next = jnp.concatenate(
        [targets[:, 1:], jnp.full((B, 1), -100, targets.dtype)], axis=1
    ).reshape(BS).astype(jnp.int32)
    mask_flat = attention_mask.reshape(BS).astype(jnp.int32)

    tok = jnp.zeros((TOK_ROWS, 128), jnp.int32)
    tok = tok.at[0:BS, 0].set(ids_flat)
    tok = tok.at[0:BS, 1].set(labels_next)
    tok = tok.at[BS, 0:BS].set(mask_flat)

    vmem = pl.BlockSpec(memory_space=pltpu.MemorySpace.VMEM)

    flops = 2 * BS * D * (2 * VP + L * (3 * D + D + 2 * DFF)) + 2 * BS * HB * 3 * D * L
    cost = pl.CostEstimate(
        flops=int(flops),
        transcendentals=int(BS * HB * L + BS * DFF * L + BS * VP),
        bytes_accessed=int(4 * (R_TOTAL * 128 + TOK_ROWS * 128 + BS * VP + 1)),
    )

    logits_p, loss2 = pl.pallas_call(
        _fused_forward_kernel,
        out_shape=(jax.ShapeDtypeStruct((BS, VP), jnp.float32),
                   jax.ShapeDtypeStruct((1, 1), jnp.float32)),
        in_specs=[vmem, vmem],
        out_specs=(vmem, vmem),
        cost_estimate=cost,
    )(tok, param_slab)

    return loss2[0, 0], logits_p[:, :V].reshape(B, S, V)


# ------------------------------ main -------------------------------
if __name__ == "__main__":
    key = jax.random.PRNGKey(0)
    kp, ki, kt = jax.random.split(key, 3)

    params = init_params(kp)
    param_slab = pack_params(params)

    input_ids = jax.random.randint(ki, (B, S), 0, V, dtype=jnp.int32)
    targets = jax.random.randint(kt, (B, S), 0, V, dtype=jnp.int32)
    attention_mask = jnp.ones((B, S), jnp.int32).at[1, S - 2:].set(0)  # pad tail of seq 1

    loss, logits = model_llm_forward(param_slab, input_ids, attention_mask, targets)
    jax.block_until_ready((loss, logits))

    assert logits.shape == (B, S, V)
    assert loss.shape == ()
    assert bool(jnp.isfinite(loss))
    print("KERNEL_OK")
</pallas_src>

<mosaic_0001>
module attributes {stable_mosaic.version = 11 : i64} {
  func.func @_fused_forward_kernel(%arg0: memref<24x128xi32, #tpu.memory_space<vmem>>, %arg1: memref<608x128xf32, #tpu.memory_space<vmem>>, %arg2: memref<16x128xf32, #tpu.memory_space<vmem>>, %arg3: memref<1x1xf32, #tpu.memory_space<vmem>>) attributes {dimension_semantics = [], scalar_prefetch = 0 : i64, scratch_operands = 0 : i64, tpu.core_type = #tpu.core_type<tc>} {
    %c0 = arith.constant 0 : index
    %c0_0 = arith.constant 0 : index
    %0 = vector.load %arg0[%c0, %c0_0] : memref<24x128xi32, #tpu.memory_space<vmem>>, vector<16x1xi32>
    %c0_1 = arith.constant 0 : index
    %c1 = arith.constant 1 : index
    %1 = vector.load %arg0[%c0_1, %c1] : memref<24x128xi32, #tpu.memory_space<vmem>>, vector<16x1xi32>
    %c16 = arith.constant 16 : index
    %c0_2 = arith.constant 0 : index
    %2 = vector.load %arg0[%c16, %c0_2] : memref<24x128xi32, #tpu.memory_space<vmem>>, vector<1x16xi32>
    %c0_3 = arith.constant 0 : index
    %c0_4 = arith.constant 0 : index
    %3 = vector.load %arg1[%c0_3, %c0_4] : memref<608x128xf32, #tpu.memory_space<vmem>>, vector<128x32xf32>
    %4 = arith.truncf %3 : vector<128x32xf32> to vector<128x32xbf16>
    %c128 = arith.constant 128 : index
    %c0_5 = arith.constant 0 : index
    %5 = vector.load %arg1[%c128, %c0_5] : memref<608x128xf32, #tpu.memory_space<vmem>>, vector<8x32xf32>
    %6 = tpu.iota {dimensions = array<i32: 1>} : vector<16x128xi32>
    %7 = vector.broadcast %0 : vector<16x1xi32> to vector<16x128xi32>
    %8 = arith.cmpi eq, %6, %7 : vector<16x128xi32>
    %9 = arith.extui %8 : vector<16x128xi1> to vector<16x128xi32>
    %10 = arith.sitofp %9 : vector<16x128xi32> to vector<16x128xf32>
    %11 = arith.truncf %10 : vector<16x128xf32> to vector<16x128xbf16>
    %cst = arith.constant dense<0.000000e+00> : vector<16x32xf32>
    %12 = tpu.matmul %11, %4, %cst {dimension_numbers = #tpu.dot_dimension_numbers<[1], [0], [0], [1], [0, 0, 1, 1], [], []>} : vector<16x128xbf16>, vector<128x32xbf16>, vector<16x32xf32> -> vector<16x32xf32>
    %13 = tpu.concatenate %5, %5 in 0 : vector<8x32xf32>, vector<8x32xf32> -> vector<16x32xf32>
    %14 = arith.addf %12, %13 : vector<16x32xf32>
    %15 = tpu.iota {dimensions = array<i32: 0>} : vector<16x16xi32>
    %16 = tpu.iota {dimensions = array<i32: 1>} : vector<16x16xi32>
    %c3_i32 = arith.constant 3 : i32
    %17 = vector.broadcast %c3_i32 : i32 to vector<16x16xi32>
    %18 = arith.shrsi %15, %17 : vector<16x16xi32>
    %c3_i32_6 = arith.constant 3 : i32
    %19 = vector.broadcast %c3_i32_6 : i32 to vector<16x16xi32>
    %20 = arith.shrsi %16, %19 : vector<16x16xi32>
    %21 = arith.cmpi eq, %18, %20 : vector<16x16xi32>
    %22 = arith.cmpi sle, %16, %15 : vector<16x16xi32>
    %23 = arith.andi %21, %22 : vector<16x16xi1>
    %c0_i32 = arith.constant 0 : i32
    %24 = vector.broadcast %c0_i32 : i32 to vector<1x16xi32>
    %25 = arith.cmpi sgt, %2, %24 : vector<1x16xi32>
    %26 = vector.broadcast %25 : vector<1x16xi1> to vector<16x16xi1>
    %27 = arith.andi %23, %26 : vector<16x16xi1>
    %cst_7 = arith.constant 0.000000e+00 : f32
    %cst_8 = arith.constant -1.000000e+09 : f32
    %28 = vector.broadcast %cst_7 : f32 to vector<16x16xf32>
    %29 = vector.broadcast %cst_8 : f32 to vector<16x16xf32>
    %30 = arith.select %27, %28, %29 : vector<16x16xi1>, vector<16x16xf32>
    %31 = tpu.concatenate %30, %30, %30, %30 in 1 : vector<16x16xf32>, vector<16x16xf32>, vector<16x16xf32>, vector<16x16xf32> -> vector<16x64xf32>
    %32 = tpu.iota {dimensions = array<i32: 0>} : vector<64x32xi32>
    %33 = tpu.iota {dimensions = array<i32: 1>} : vector<64x32xi32>
    %c4_i32 = arith.constant 4 : i32
    %34 = vector.broadcast %c4_i32 : i32 to vector<64x32xi32>
    %35 = arith.shrsi %32, %34 : vector<64x32xi32>
    %c3_i32_9 = arith.constant 3 : i32
    %36 = vector.broadcast %c3_i32_9 : i32 to vector<64x32xi32>
    %37 = arith.shrsi %33, %36 : vector<64x32xi32>
    %38 = arith.cmpi eq, %35, %37 : vector<64x32xi32>
    %39 = arith.extui %38 : vector<64x32xi1> to vector<64x32xi32>
    %40 = arith.sitofp %39 : vector<64x32xi32> to vector<64x32xf32>
    %41 = arith.truncf %40 : vector<64x32xf32> to vector<64x32xbf16>
    %c138 = arith.constant 138 : index
    %c0_10 = arith.constant 0 : index
    %42 = vector.load %arg1[%c138, %c0_10] : memref<608x128xf32, #tpu.memory_space<vmem>>, vector<1x32xf32>
    %c139 = arith.constant 139 : index
    %c0_11 = arith.constant 0 : index
    %43 = vector.load %arg1[%c139, %c0_11] : memref<608x128xf32, #tpu.memory_space<vmem>>, vector<1x32xf32>
    %c140 = arith.constant 140 : index
    %c0_12 = arith.constant 0 : index
    %44 = vector.load %arg1[%c140, %c0_12] : memref<608x128xf32, #tpu.memory_space<vmem>>, vector<1x96xf32>
    %c141 = arith.constant 141 : index
    %c0_13 = arith.constant 0 : index
    %45 = vector.load %arg1[%c141, %c0_13] : memref<608x128xf32, #tpu.memory_space<vmem>>, vector<1x32xf32>
    %c142 = arith.constant 142 : index
    %c0_14 = arith.constant 0 : index
    %46 = vector.load %arg1[%c142, %c0_14] : memref<608x128xf32, #tpu.memory_space<vmem>>, vector<1x32xf32>
    %c143 = arith.constant 143 : index
    %c0_15 = arith.constant 0 : index
    %47 = vector.load %arg1[%c143, %c0_15] : memref<608x128xf32, #tpu.memory_space<vmem>>, vector<1x32xf32>
    %c144 = arith.constant 144 : index
    %c0_16 = arith.constant 0 : index
    %48 = vector.load %arg1[%c144, %c0_16] : memref<608x128xf32, #tpu.memory_space<vmem>>, vector<1x128xf32>
    %c145 = arith.constant 145 : index
    %c0_17 = arith.constant 0 : index
    %49 = vector.load %arg1[%c145, %c0_17] : memref<608x128xf32, #tpu.memory_space<vmem>>, vector<1x32xf32>
    %c160 = arith.constant 160 : index
    %c0_18 = arith.constant 0 : index
    %50 = vector.load %arg1[%c160, %c0_18] : memref<608x128xf32, #tpu.memory_space<vmem>>, vector<32x96xf32>
    %51 = arith.truncf %50 : vector<32x96xf32> to vector<32x96xbf16>
    %c192 = arith.constant 192 : index
    %c0_19 = arith.constant 0 : index
    %52 = vector.load %arg1[%c192, %c0_19] : memref<608x128xf32, #tpu.memory_space<vmem>>, vector<32x32xf32>
    %53 = arith.truncf %52 : vector<32x32xf32> to vector<32x32xbf16>
    %c224 = arith.constant 224 : index
    %c0_20 = arith.constant 0 : index
    %54 = vector.load %arg1[%c224, %c0_20] : memref<608x128xf32, #tpu.memory_space<vmem>>, vector<32x128xf32>
    %55 = arith.truncf %54 : vector<32x128xf32> to vector<32x128xbf16>
    %c256 = arith.constant 256 : index
    %c0_21 = arith.constant 0 : index
    %56 = vector.load %arg1[%c256, %c0_21] : memref<608x128xf32, #tpu.memory_space<vmem>>, vector<128x32xf32>
    %57 = arith.truncf %56 : vector<128x32xf32> to vector<128x32xbf16>
    %cst_22 = arith.constant dense<0.000000e+00> : vector<16xf32>
    %58 = vector.multi_reduction <add>, %14, %cst_22 [1] : vector<16x32xf32> to vector<16xf32>
    %59 = vector.shape_cast %58 : vector<16xf32> to vector<16x1xf32>
    %cst_23 = arith.constant 3.200000e+01 : f32
    %60 = vector.broadcast %cst_23 : f32 to vector<16x1xf32>
    %61 = arith.divf %59, %60 : vector<16x1xf32>
    %62 = vector.broadcast %61 : vector<16x1xf32> to vector<16x32xf32>
    %63 = arith.subf %14, %62 : vector<16x32xf32>
    %64 = arith.mulf %63, %63 : vector<16x32xf32>
    %cst_24 = arith.constant dense<0.000000e+00> : vector<16xf32>
    %65 = vector.multi_reduction <add>, %64, %cst_24 [1] : vector<16x32xf32> to vector<16xf32>
    %66 = vector.shape_cast %65 : vector<16xf32> to vector<16x1xf32>
    %cst_25 = arith.constant 3.200000e+01 : f32
    %67 = vector.broadcast %cst_25 : f32 to vector<16x1xf32>
    %68 = arith.divf %66, %67 : vector<16x1xf32>
    %69 = vector.broadcast %61 : vector<16x1xf32> to vector<16x32xf32>
    %70 = arith.subf %14, %69 : vector<16x32xf32>
    %cst_26 = arith.constant 9.99999974E-6 : f32
    %71 = vector.broadcast %cst_26 : f32 to vector<16x1xf32>
    %72 = arith.addf %68, %71 : vector<16x1xf32>
    %73 = math.rsqrt %72 : vector<16x1xf32>
    %74 = vector.broadcast %73 : vector<16x1xf32> to vector<16x32xf32>
    %75 = arith.mulf %70, %74 : vector<16x32xf32>
    %76 = vector.broadcast %42 : vector<1x32xf32> to vector<16x32xf32>
    %77 = arith.mulf %75, %76 : vector<16x32xf32>
    %78 = vector.broadcast %43 : vector<1x32xf32> to vector<16x32xf32>
    %79 = arith.addf %77, %78 : vector<16x32xf32>
    %80 = arith.truncf %79 : vector<16x32xf32> to vector<16x32xbf16>
    %cst_27 = arith.constant dense<0.000000e+00> : vector<16x96xf32>
    %81 = tpu.matmul %80, %51, %cst_27 {dimension_numbers = #tpu.dot_dimension_numbers<[1], [0], [0], [1], [0, 0, 1, 1], [], []>} : vector<16x32xbf16>, vector<32x96xbf16>, vector<16x96xf32> -> vector<16x96xf32>
    %82 = vector.broadcast %44 : vector<1x96xf32> to vector<16x96xf32>
    %83 = arith.addf %81, %82 : vector<16x96xf32>
    %84 = vector.extract_strided_slice %83 {offsets = [0, 0], sizes = [16, 32], strides = [1, 1]} : vector<16x96xf32> to vector<16x32xf32>
    %85 = vector.extract_strided_slice %83 {offsets = [0, 32], sizes = [16, 32], strides = [1, 1]} : vector<16x96xf32> to vector<16x32xf32>
    %86 = vector.extract_strided_slice %83 {offsets = [0, 64], sizes = [16, 32], strides = [1, 1]} : vector<16x96xf32> to vector<16x32xf32>
    %87 = tpu.concatenate %85, %85, %85, %85 in 0 : vector<16x32xf32>, vector<16x32xf32>, vector<16x32xf32>, vector<16x32xf32> -> vector<64x32xf32>
    %88 = arith.mulf %87, %40 : vector<64x32xf32>
    %89 = arith.truncf %88 : vector<64x32xf32> to vector<64x32xbf16>
    %90 = tpu.concatenate %86, %86, %86, %86 in 0 : vector<16x32xf32>, vector<16x32xf32>, vector<16x32xf32>, vector<16x32xf32> -> vector<64x32xf32>
    %91 = arith.mulf %90, %40 : vector<64x32xf32>
    %92 = arith.truncf %91 : vector<64x32xf32> to vector<64x32xbf16>
    %93 = arith.truncf %84 : vector<16x32xf32> to vector<16x32xbf16>
    %cst_28 = arith.constant dense<0.000000e+00> : vector<16x64xf32>
    %94 = tpu.matmul %93, %89, %cst_28 {dimension_numbers = #tpu.dot_dimension_numbers<[1], [1], [0], [0], [0, 0, 1, 0], [], []>} : vector<16x32xbf16>, vector<64x32xbf16>, vector<16x64xf32> -> vector<16x64xf32>
    %cst_29 = arith.constant 0.353553385 : f32
    %95 = vector.broadcast %cst_29 : f32 to vector<16x64xf32>
    %96 = arith.mulf %94, %95 : vector<16x64xf32>
    %97 = arith.addf %96, %31 : vector<16x64xf32>
    %cst_30 = arith.constant dense<0xFF800000> : vector<16xf32>
    %98 = vector.multi_reduction <maximumf>, %97, %cst_30 [1] : vector<16x64xf32> to vector<16xf32>
    %99 = vector.shape_cast %98 : vector<16xf32> to vector<16x1xf32>
    %100 = vector.broadcast %99 : vector<16x1xf32> to vector<16x64xf32>
    %101 = arith.subf %97, %100 : vector<16x64xf32>
    %102 = math.exp %101 : vector<16x64xf32>
    %103 = arith.truncf %102 : vector<16x64xf32> to vector<16x64xbf16>
    %cst_31 = arith.constant dense<0.000000e+00> : vector<16x32xf32>
    %104 = tpu.matmul %103, %92, %cst_31 {dimension_numbers = #tpu.dot_dimension_numbers<[1], [0], [0], [1], [0, 0, 1, 1], [], []>} : vector<16x64xbf16>, vector<64x32xbf16>, vector<16x32xf32> -> vector<16x32xf32>
    %cst_32 = arith.constant dense<0.000000e+00> : vector<16x32xf32>
    %105 = tpu.matmul %103, %41, %cst_32 {dimension_numbers = #tpu.dot_dimension_numbers<[1], [0], [0], [1], [0, 0, 1, 1], [], []>} : vector<16x64xbf16>, vector<64x32xbf16>, vector<16x32xf32> -> vector<16x32xf32>
    %cst_33 = arith.constant 1.000000e-30 : f32
    %106 = vector.broadcast %cst_33 : f32 to vector<16x32xf32>
    %107 = arith.maximumf %105, %106 : vector<16x32xf32>
    %108 = tpu.reciprocal %107 : vector<16x32xf32> -> vector<16x32xf32>
    %109 = arith.mulf %104, %108 : vector<16x32xf32>
    %110 = arith.truncf %109 : vector<16x32xf32> to vector<16x32xbf16>
    %cst_34 = arith.constant dense<0.000000e+00> : vector<16x32xf32>
    %111 = tpu.matmul %110, %53, %cst_34 {dimension_numbers = #tpu.dot_dimension_numbers<[1], [0], [0], [1], [0, 0, 1, 1], [], []>} : vector<16x32xbf16>, vector<32x32xbf16>, vector<16x32xf32> -> vector<16x32xf32>
    %112 = arith.addf %14, %111 : vector<16x32xf32>
    %113 = vector.broadcast %45 : vector<1x32xf32> to vector<16x32xf32>
    %114 = arith.addf %112, %113 : vector<16x32xf32>
    %cst_35 = arith.constant dense<0.000000e+00> : vector<16xf32>
    %115 = vector.multi_reduction <add>, %114, %cst_35 [1] : vector<16x32xf32> to vector<16xf32>
    %116 = vector.shape_cast %115 : vector<16xf32> to vector<16x1xf32>
    %cst_36 = arith.constant 3.200000e+01 : f32
    %117 = vector.broadcast %cst_36 : f32 to vector<16x1xf32>
    %118 = arith.divf %116, %117 : vector<16x1xf32>
    %119 = vector.broadcast %118 : vector<16x1xf32> to vector<16x32xf32>
    %120 = arith.subf %114, %119 : vector<16x32xf32>
    %121 = arith.mulf %120, %120 : vector<16x32xf32>
    %cst_37 = arith.constant dense<0.000000e+00> : vector<16xf32>
    %122 = vector.multi_reduction <add>, %121, %cst_37 [1] : vector<16x32xf32> to vector<16xf32>
    %123 = vector.shape_cast %122 : vector<16xf32> to vector<16x1xf32>
    %cst_38 = arith.constant 3.200000e+01 : f32
    %124 = vector.broadcast %cst_38 : f32 to vector<16x1xf32>
    %125 = arith.divf %123, %124 : vector<16x1xf32>
    %126 = vector.broadcast %118 : vector<16x1xf32> to vector<16x32xf32>
    %127 = arith.subf %114, %126 : vector<16x32xf32>
    %cst_39 = arith.constant 9.99999974E-6 : f32
    %128 = vector.broadcast %cst_39 : f32 to vector<16x1xf32>
    %129 = arith.addf %125, %128 : vector<16x1xf32>
    %130 = math.rsqrt %129 : vector<16x1xf32>
    %131 = vector.broadcast %130 : vector<16x1xf32> to vector<16x32xf32>
    %132 = arith.mulf %127, %131 : vector<16x32xf32>
    %133 = vector.broadcast %46 : vector<1x32xf32> to vector<16x32xf32>
    %134 = arith.mulf %132, %133 : vector<16x32xf32>
    %135 = vector.broadcast %47 : vector<1x32xf32> to vector<16x32xf32>
    %136 = arith.addf %134, %135 : vector<16x32xf32>
    %137 = arith.truncf %136 : vector<16x32xf32> to vector<16x32xbf16>
    %cst_40 = arith.constant dense<0.000000e+00> : vector<16x128xf32>
    %138 = tpu.matmul %137, %55, %cst_40 {dimension_numbers = #tpu.dot_dimension_numbers<[1], [0], [0], [1], [0, 0, 1, 1], [], []>} : vector<16x32xbf16>, vector<32x128xbf16>, vector<16x128xf32> -> vector<16x128xf32>
    %139 = vector.broadcast %48 : vector<1x128xf32> to vector<16x128xf32>
    %140 = arith.addf %138, %139 : vector<16x128xf32>
    %cst_41 = arith.constant 5.000000e-01 : f32
    %141 = vector.broadcast %cst_41 : f32 to vector<16x128xf32>
    %142 = arith.mulf %141, %140 : vector<16x128xf32>
    %cst_42 = arith.constant 4.471500e-02 : f32
    %143 = vector.broadcast %cst_42 : f32 to vector<16x128xf32>
    %144 = arith.mulf %143, %140 : vector<16x128xf32>
    %145 = arith.mulf %144, %140 : vector<16x128xf32>
    %146 = arith.mulf %145, %140 : vector<16x128xf32>
    %147 = arith.addf %140, %146 : vector<16x128xf32>
    %cst_43 = arith.constant 0.797884583 : f32
    %148 = vector.broadcast %cst_43 : f32 to vector<16x128xf32>
    %149 = arith.mulf %148, %147 : vector<16x128xf32>
    %150 = math.tanh %149 : vector<16x128xf32>
    %cst_44 = arith.constant 1.000000e+00 : f32
    %151 = vector.broadcast %cst_44 : f32 to vector<16x128xf32>
    %152 = arith.addf %151, %150 : vector<16x128xf32>
    %153 = arith.mulf %142, %152 : vector<16x128xf32>
    %154 = arith.truncf %153 : vector<16x128xf32> to vector<16x128xbf16>
    %cst_45 = arith.constant dense<0.000000e+00> : vector<16x32xf32>
    %155 = tpu.matmul %154, %57, %cst_45 {dimension_numbers = #tpu.dot_dimension_numbers<[1], [0], [0], [1], [0, 0, 1, 1], [], []>} : vector<16x128xbf16>, vector<128x32xbf16>, vector<16x32xf32> -> vector<16x32xf32>
    %156 = arith.addf %114, %155 : vector<16x32xf32>
    %157 = vector.broadcast %49 : vector<1x32xf32> to vector<16x32xf32>
    %158 = arith.addf %156, %157 : vector<16x32xf32>
    %c146 = arith.constant 146 : index
    %c0_46 = arith.constant 0 : index
    %159 = vector.load %arg1[%c146, %c0_46] : memref<608x128xf32, #tpu.memory_space<vmem>>, vector<1x32xf32>
    %c147 = arith.constant 147 : index
    %c0_47 = arith.constant 0 : index
    %160 = vector.load %arg1[%c147, %c0_47] : memref<608x128xf32, #tpu.memory_space<vmem>>, vector<1x32xf32>
    %c148 = arith.constant 148 : index
    %c0_48 = arith.constant 0 : index
    %161 = vector.load %arg1[%c148, %c0_48] : memref<608x128xf32, #tpu.memory_space<vmem>>, vector<1x96xf32>
    %c149 = arith.constant 149 : index
    %c0_49 = arith.constant 0 : index
    %162 = vector.load %arg1[%c149, %c0_49] : memref<608x128xf32, #tpu.memory_space<vmem>>, vector<1x32xf32>
    %c150 = arith.constant 150 : index
    %c0_50 = arith.constant 0 : index
    %163 = vector.load %arg1[%c150, %c0_50] : memref<608x128xf32, #tpu.memory_space<vmem>>, vector<1x32xf32>
    %c151 = arith.constant 151 : index
    %c0_51 = arith.constant 0 : index
    %164 = vector.load %arg1[%c151, %c0_51] : memref<608x128xf32, #tpu.memory_space<vmem>>, vector<1x32xf32>
    %c152 = arith.constant 152 : index
    %c0_52 = arith.constant 0 : index
    %165 = vector.load %arg1[%c152, %c0_52] : memref<608x128xf32, #tpu.memory_space<vmem>>, vector<1x128xf32>
    %c153 = arith.constant 153 : index
    %c0_53 = arith.constant 0 : index
    %166 = vector.load %arg1[%c153, %c0_53] : memref<608x128xf32, #tpu.memory_space<vmem>>, vector<1x32xf32>
    %c384 = arith.constant 384 : index
    %c0_54 = arith.constant 0 : index
    %167 = vector.load %arg1[%c384, %c0_54] : memref<608x128xf32, #tpu.memory_space<vmem>>, vector<32x96xf32>
    %168 = arith.truncf %167 : vector<32x96xf32> to vector<32x96xbf16>
    %c416 = arith.constant 416 : index
    %c0_55 = arith.constant 0 : index
    %169 = vector.load %arg1[%c416, %c0_55] : memref<608x128xf32, #tpu.memory_space<vmem>>, vector<32x32xf32>
    %170 = arith.truncf %169 : vector<32x32xf32> to vector<32x32xbf16>
    %c448 = arith.constant 448 : index
    %c0_56 = arith.constant 0 : index
    %171 = vector.load %arg1[%c448, %c0_56] : memref<608x128xf32, #tpu.memory_space<vmem>>, vector<32x128xf32>
    %172 = arith.truncf %171 : vector<32x128xf32> to vector<32x128xbf16>
    %c480 = arith.constant 480 : index
    %c0_57 = arith.constant 0 : index
    %173 = vector.load %arg1[%c480, %c0_57] : memref<608x128xf32, #tpu.memory_space<vmem>>, vector<128x32xf32>
    %174 = arith.truncf %173 : vector<128x32xf32> to vector<128x32xbf16>
    %cst_58 = arith.constant dense<0.000000e+00> : vector<16xf32>
    %175 = vector.multi_reduction <add>, %158, %cst_58 [1] : vector<16x32xf32> to vector<16xf32>
    %176 = vector.shape_cast %175 : vector<16xf32> to vector<16x1xf32>
    %cst_59 = arith.constant 3.200000e+01 : f32
    %177 = vector.broadcast %cst_59 : f32 to vector<16x1xf32>
    %178 = arith.divf %176, %177 : vector<16x1xf32>
    %179 = vector.broadcast %178 : vector<16x1xf32> to vector<16x32xf32>
    %180 = arith.subf %158, %179 : vector<16x32xf32>
    %181 = arith.mulf %180, %180 : vector<16x32xf32>
    %cst_60 = arith.constant dense<0.000000e+00> : vector<16xf32>
    %182 = vector.multi_reduction <add>, %181, %cst_60 [1] : vector<16x32xf32> to vector<16xf32>
    %183 = vector.shape_cast %182 : vector<16xf32> to vector<16x1xf32>
    %cst_61 = arith.constant 3.200000e+01 : f32
    %184 = vector.broadcast %cst_61 : f32 to vector<16x1xf32>
    %185 = arith.divf %183, %184 : vector<16x1xf32>
    %186 = vector.broadcast %178 : vector<16x1xf32> to vector<16x32xf32>
    %187 = arith.subf %158, %186 : vector<16x32xf32>
    %cst_62 = arith.constant 9.99999974E-6 : f32
    %188 = vector.broadcast %cst_62 : f32 to vector<16x1xf32>
    %189 = arith.addf %185, %188 : vector<16x1xf32>
    %190 = math.rsqrt %189 : vector<16x1xf32>
    %191 = vector.broadcast %190 : vector<16x1xf32> to vector<16x32xf32>
    %192 = arith.mulf %187, %191 : vector<16x32xf32>
    %193 = vector.broadcast %159 : vector<1x32xf32> to vector<16x32xf32>
    %194 = arith.mulf %192, %193 : vector<16x32xf32>
    %195 = vector.broadcast %160 : vector<1x32xf32> to vector<16x32xf32>
    %196 = arith.addf %194, %195 : vector<16x32xf32>
    %197 = arith.truncf %196 : vector<16x32xf32> to vector<16x32xbf16>
    %cst_63 = arith.constant dense<0.000000e+00> : vector<16x96xf32>
    %198 = tpu.matmul %197, %168, %cst_63 {dimension_numbers = #tpu.dot_dimension_numbers<[1], [0], [0], [1], [0, 0, 1, 1], [], []>} : vector<16x32xbf16>, vector<32x96xbf16>, vector<16x96xf32> -> vector<16x96xf32>
    %199 = vector.broadcast %161 : vector<1x96xf32> to vector<16x96xf32>
    %200 = arith.addf %198, %199 : vector<16x96xf32>
    %201 = vector.extract_strided_slice %200 {offsets = [0, 0], sizes = [16, 32], strides = [1, 1]} : vector<16x96xf32> to vector<16x32xf32>
    %202 = vector.extract_strided_slice %200 {offsets = [0, 32], sizes = [16, 32], strides = [1, 1]} : vector<16x96xf32> to vector<16x32xf32>
    %203 = vector.extract_strided_slice %200 {offsets = [0, 64], sizes = [16, 32], strides = [1, 1]} : vector<16x96xf32> to vector<16x32xf32>
    %204 = tpu.concatenate %202, %202, %202, %202 in 0 : vector<16x32xf32>, vector<16x32xf32>, vector<16x32xf32>, vector<16x32xf32> -> vector<64x32xf32>
    %205 = arith.mulf %204, %40 : vector<64x32xf32>
    %206 = arith.truncf %205 : vector<64x32xf32> to vector<64x32xbf16>
    %207 = tpu.concatenate %203, %203, %203, %203 in 0 : vector<16x32xf32>, vector<16x32xf32>, vector<16x32xf32>, vector<16x32xf32> -> vector<64x32xf32>
    %208 = arith.mulf %207, %40 : vector<64x32xf32>
    %209 = arith.truncf %208 : vector<64x32xf32> to vector<64x32xbf16>
    %210 = arith.truncf %201 : vector<16x32xf32> to vector<16x32xbf16>
    %cst_64 = arith.constant dense<0.000000e+00> : vector<16x64xf32>
    %211 = tpu.matmul %210, %206, %cst_64 {dimension_numbers = #tpu.dot_dimension_numbers<[1], [1], [0], [0], [0, 0, 1, 0], [], []>} : vector<16x32xbf16>, vector<64x32xbf16>, vector<16x64xf32> -> vector<16x64xf32>
    %cst_65 = arith.constant 0.353553385 : f32
    %212 = vector.broadcast %cst_65 : f32 to vector<16x64xf32>
    %213 = arith.mulf %211, %212 : vector<16x64xf32>
    %214 = arith.addf %213, %31 : vector<16x64xf32>
    %cst_66 = arith.constant dense<0xFF800000> : vector<16xf32>
    %215 = vector.multi_reduction <maximumf>, %214, %cst_66 [1] : vector<16x64xf32> to vector<16xf32>
    %216 = vector.shape_cast %215 : vector<16xf32> to vector<16x1xf32>
    %217 = vector.broadcast %216 : vector<16x1xf32> to vector<16x64xf32>
    %218 = arith.subf %214, %217 : vector<16x64xf32>
    %219 = math.exp %218 : vector<16x64xf32>
    %220 = arith.truncf %219 : vector<16x64xf32> to vector<16x64xbf16>
    %cst_67 = arith.constant dense<0.000000e+00> : vector<16x32xf32>
    %221 = tpu.matmul %220, %209, %cst_67 {dimension_numbers = #tpu.dot_dimension_numbers<[1], [0], [0], [1], [0, 0, 1, 1], [], []>} : vector<16x64xbf16>, vector<64x32xbf16>, vector<16x32xf32> -> vector<16x32xf32>
    %cst_68 = arith.constant dense<0.000000e+00> : vector<16x32xf32>
    %222 = tpu.matmul %220, %41, %cst_68 {dimension_numbers = #tpu.dot_dimension_numbers<[1], [0], [0], [1], [0, 0, 1, 1], [], []>} : vector<16x64xbf16>, vector<64x32xbf16>, vector<16x32xf32> -> vector<16x32xf32>
    %cst_69 = arith.constant 1.000000e-30 : f32
    %223 = vector.broadcast %cst_69 : f32 to vector<16x32xf32>
    %224 = arith.maximumf %222, %223 : vector<16x32xf32>
    %225 = tpu.reciprocal %224 : vector<16x32xf32> -> vector<16x32xf32>
    %226 = arith.mulf %221, %225 : vector<16x32xf32>
    %227 = arith.truncf %226 : vector<16x32xf32> to vector<16x32xbf16>
    %cst_70 = arith.constant dense<0.000000e+00> : vector<16x32xf32>
    %228 = tpu.matmul %227, %170, %cst_70 {dimension_numbers = #tpu.dot_dimension_numbers<[1], [0], [0], [1], [0, 0, 1, 1], [], []>} : vector<16x32xbf16>, vector<32x32xbf16>, vector<16x32xf32> -> vector<16x32xf32>
    %229 = arith.addf %158, %228 : vector<16x32xf32>
    %230 = vector.broadcast %162 : vector<1x32xf32> to vector<16x32xf32>
    %231 = arith.addf %229, %230 : vector<16x32xf32>
    %cst_71 = arith.constant dense<0.000000e+00> : vector<16xf32>
    %232 = vector.multi_reduction <add>, %231, %cst_71 [1] : vector<16x32xf32> to vector<16xf32>
    %233 = vector.shape_cast %232 : vector<16xf32> to vector<16x1xf32>
    %cst_72 = arith.constant 3.200000e+01 : f32
    %234 = vector.broadcast %cst_72 : f32 to vector<16x1xf32>
    %235 = arith.divf %233, %234 : vector<16x1xf32>
    %236 = vector.broadcast %235 : vector<16x1xf32> to vector<16x32xf32>
    %237 = arith.subf %231, %236 : vector<16x32xf32>
    %238 = arith.mulf %237, %237 : vector<16x32xf32>
    %cst_73 = arith.constant dense<0.000000e+00> : vector<16xf32>
    %239 = vector.multi_reduction <add>, %238, %cst_73 [1] : vector<16x32xf32> to vector<16xf32>
    %240 = vector.shape_cast %239 : vector<16xf32> to vector<16x1xf32>
    %cst_74 = arith.constant 3.200000e+01 : f32
    %241 = vector.broadcast %cst_74 : f32 to vector<16x1xf32>
    %242 = arith.divf %240, %241 : vector<16x1xf32>
    %243 = vector.broadcast %235 : vector<16x1xf32> to vector<16x32xf32>
    %244 = arith.subf %231, %243 : vector<16x32xf32>
    %cst_75 = arith.constant 9.99999974E-6 : f32
    %245 = vector.broadcast %cst_75 : f32 to vector<16x1xf32>
    %246 = arith.addf %242, %245 : vector<16x1xf32>
    %247 = math.rsqrt %246 : vector<16x1xf32>
    %248 = vector.broadcast %247 : vector<16x1xf32> to vector<16x32xf32>
    %249 = arith.mulf %244, %248 : vector<16x32xf32>
    %250 = vector.broadcast %163 : vector<1x32xf32> to vector<16x32xf32>
    %251 = arith.mulf %249, %250 : vector<16x32xf32>
    %252 = vector.broadcast %164 : vector<1x32xf32> to vector<16x32xf32>
    %253 = arith.addf %251, %252 : vector<16x32xf32>
    %254 = arith.truncf %253 : vector<16x32xf32> to vector<16x32xbf16>
    %cst_76 = arith.constant dense<0.000000e+00> : vector<16x128xf32>
    %255 = tpu.matmul %254, %172, %cst_76 {dimension_numbers = #tpu.dot_dimension_numbers<[1], [0], [0], [1], [0, 0, 1, 1], [], []>} : vector<16x32xbf16>, vector<32x128xbf16>, vector<16x128xf32> -> vector<16x128xf32>
    %256 = vector.broadcast %165 : vector<1x128xf32> to vector<16x128xf32>
    %257 = arith.addf %255, %256 : vector<16x128xf32>
    %cst_77 = arith.constant 5.000000e-01 : f32
    %258 = vector.broadcast %cst_77 : f32 to vector<16x128xf32>
    %259 = arith.mulf %258, %257 : vector<16x128xf32>
    %cst_78 = arith.constant 4.471500e-02 : f32
    %260 = vector.broadcast %cst_78 : f32 to vector<16x128xf32>
    %261 = arith.mulf %260, %257 : vector<16x128xf32>
    %262 = arith.mulf %261, %257 : vector<16x128xf32>
    %263 = arith.mulf %262, %257 : vector<16x128xf32>
    %264 = arith.addf %257, %263 : vector<16x128xf32>
    %cst_79 = arith.constant 0.797884583 : f32
    %265 = vector.broadcast %cst_79 : f32 to vector<16x128xf32>
    %266 = arith.mulf %265, %264 : vector<16x128xf32>
    %267 = math.tanh %266 : vector<16x128xf32>
    %cst_80 = arith.constant 1.000000e+00 : f32
    %268 = vector.broadcast %cst_80 : f32 to vector<16x128xf32>
    %269 = arith.addf %268, %267 : vector<16x128xf32>
    %270 = arith.mulf %259, %269 : vector<16x128xf32>
    %271 = arith.truncf %270 : vector<16x128xf32> to vector<16x128xbf16>
    %cst_81 = arith.constant dense<0.000000e+00> : vector<16x32xf32>
    %272 = tpu.matmul %271, %174, %cst_81 {dimension_numbers = #tpu.dot_dimension_numbers<[1], [0], [0], [1], [0, 0, 1, 1], [], []>} : vector<16x128xbf16>, vector<128x32xbf16>, vector<16x32xf32> -> vector<16x32xf32>
    %273 = arith.addf %231, %272 : vector<16x32xf32>
    %274 = vector.broadcast %166 : vector<1x32xf32> to vector<16x32xf32>
    %275 = arith.addf %273, %274 : vector<16x32xf32>
    %c136 = arith.constant 136 : index
    %c0_82 = arith.constant 0 : index
    %276 = vector.load %arg1[%c136, %c0_82] : memref<608x128xf32, #tpu.memory_space<vmem>>, vector<1x32xf32>
    %c137 = arith.constant 137 : index
    %c0_83 = arith.constant 0 : index
    %277 = vector.load %arg1[%c137, %c0_83] : memref<608x128xf32, #tpu.memory_space<vmem>>, vector<1x32xf32>
    %cst_84 = arith.constant dense<0.000000e+00> : vector<16xf32>
    %278 = vector.multi_reduction <add>, %275, %cst_84 [1] : vector<16x32xf32> to vector<16xf32>
    %279 = vector.shape_cast %278 : vector<16xf32> to vector<16x1xf32>
    %cst_85 = arith.constant 3.200000e+01 : f32
    %280 = vector.broadcast %cst_85 : f32 to vector<16x1xf32>
    %281 = arith.divf %279, %280 : vector<16x1xf32>
    %282 = vector.broadcast %281 : vector<16x1xf32> to vector<16x32xf32>
    %283 = arith.subf %275, %282 : vector<16x32xf32>
    %284 = arith.mulf %283, %283 : vector<16x32xf32>
    %cst_86 = arith.constant dense<0.000000e+00> : vector<16xf32>
    %285 = vector.multi_reduction <add>, %284, %cst_86 [1] : vector<16x32xf32> to vector<16xf32>
    %286 = vector.shape_cast %285 : vector<16xf32> to vector<16x1xf32>
    %cst_87 = arith.constant 3.200000e+01 : f32
    %287 = vector.broadcast %cst_87 : f32 to vector<16x1xf32>
    %288 = arith.divf %286, %287 : vector<16x1xf32>
    %289 = vector.broadcast %281 : vector<16x1xf32> to vector<16x32xf32>
    %290 = arith.subf %275, %289 : vector<16x32xf32>
    %cst_88 = arith.constant 9.99999974E-6 : f32
    %291 = vector.broadcast %cst_88 : f32 to vector<16x1xf32>
    %292 = arith.addf %288, %291 : vector<16x1xf32>
    %293 = math.rsqrt %292 : vector<16x1xf32>
    %294 = vector.broadcast %293 : vector<16x1xf32> to vector<16x32xf32>
    %295 = arith.mulf %290, %294 : vector<16x32xf32>
    %296 = vector.broadcast %276 : vector<1x32xf32> to vector<16x32xf32>
    %297 = arith.mulf %295, %296 : vector<16x32xf32>
    %298 = vector.broadcast %277 : vector<1x32xf32> to vector<16x32xf32>
    %299 = arith.addf %297, %298 : vector<16x32xf32>
    %300 = arith.truncf %299 : vector<16x32xf32> to vector<16x32xbf16>
    %cst_89 = arith.constant dense<0.000000e+00> : vector<16x128xf32>
    %301 = tpu.matmul %300, %4, %cst_89 {dimension_numbers = #tpu.dot_dimension_numbers<[1], [1], [0], [0], [0, 0, 1, 0], [], []>} : vector<16x32xbf16>, vector<128x32xbf16>, vector<16x128xf32> -> vector<16x128xf32>
    %c0_90 = arith.constant 0 : index
    %c0_91 = arith.constant 0 : index
    %302 = vector.load %arg2[%c0_90, %c0_91] : memref<16x128xf32, #tpu.memory_space<vmem>>, vector<16x128xf32>
    tpu.vector_store %arg2[%c0_90, %c0_91], %301 {strides = array<i32>} : memref<16x128xf32, #tpu.memory_space<vmem>>, vector<16x128xf32>,
    %c64_i32 = arith.constant 64 : i32
    %303 = vector.broadcast %c64_i32 : i32 to vector<16x128xi32>
    %304 = arith.cmpi sge, %6, %303 : vector<16x128xi32>
    %cst_92 = arith.constant -1.000000e+09 : f32
    %305 = vector.broadcast %cst_92 : f32 to vector<16x128xf32>
    %306 = arith.select %304, %305, %301 : vector<16x128xi1>, vector<16x128xf32>
    %cst_93 = arith.constant dense<0xFF800000> : vector<16xf32>
    %307 = vector.multi_reduction <maximumf>, %306, %cst_93 [1] : vector<16x128xf32> to vector<16xf32>
    %308 = vector.shape_cast %307 : vector<16xf32> to vector<16x1xf32>
    %309 = vector.broadcast %308 : vector<16x1xf32> to vector<16x128xf32>
    %310 = arith.subf %306, %309 : vector<16x128xf32>
    %311 = math.exp %310 : vector<16x128xf32>
    %cst_94 = arith.constant dense<0.000000e+00> : vector<16xf32>
    %312 = vector.multi_reduction <add>, %311, %cst_94 [1] : vector<16x128xf32> to vector<16xf32>
    %313 = vector.shape_cast %312 : vector<16xf32> to vector<16x1xf32>
    %314 = math.log %313 : vector<16x1xf32>
    %315 = arith.addf %314, %308 : vector<16x1xf32>
    %316 = vector.broadcast %1 : vector<16x1xi32> to vector<16x128xi32>
    %317 = arith.cmpi eq, %6, %316 : vector<16x128xi32>
    %318 = arith.extui %317 : vector<16x128xi1> to vector<16x128xi32>
    %319 = arith.sitofp %318 : vector<16x128xi32> to vector<16x128xf32>
    %320 = arith.mulf %301, %319 : vector<16x128xf32>
    %cst_95 = arith.constant dense<0.000000e+00> : vector<16xf32>
    %321 = vector.multi_reduction <add>, %320, %cst_95 [1] : vector<16x128xf32> to vector<16xf32>
    %322 = vector.shape_cast %321 : vector<16xf32> to vector<16x1xf32>
    %c-100_i32 = arith.constant -100 : i32
    %323 = vector.broadcast %c-100_i32 : i32 to vector<16x1xi32>
    %324 = arith.cmpi ne, %1, %323 : vector<16x1xi32>
    %325 = arith.extui %324 : vector<16x1xi1> to vector<16x1xi32>
    %326 = arith.sitofp %325 : vector<16x1xi32> to vector<16x1xf32>
    %327 = arith.subf %315, %322 : vector<16x1xf32>
    %328 = arith.mulf %327, %326 : vector<16x1xf32>
    %cst_96 = arith.constant dense<0.000000e+00> : vector<1xf32>
    %329 = vector.multi_reduction <add>, %328, %cst_96 [0] : vector<16x1xf32> to vector<1xf32>
    %330 = vector.shape_cast %329 : vector<1xf32> to vector<1x1xf32>
    %cst_97 = arith.constant dense<0.000000e+00> : vector<1xf32>
    %331 = vector.multi_reduction <add>, %326, %cst_97 [0] : vector<16x1xf32> to vector<1xf32>
    %332 = vector.shape_cast %331 : vector<1xf32> to vector<1x1xf32>
    %333 = tpu.reciprocal %332 : vector<1x1xf32> -> vector<1x1xf32>
    %334 = arith.mulf %330, %333 : vector<1x1xf32>
    %c0_98 = arith.constant 0 : index
    %c0_99 = arith.constant 0 : index
    %335 = vector.load %arg3[%c0_98, %c0_99] : memref<1x1xf32, #tpu.memory_space<vmem>>, vector<1x1xf32>
    tpu.vector_store %arg3[%c0_98, %c0_99], %334 {strides = array<i32>} : memref<1x1xf32, #tpu.memory_space<vmem>>, vector<1x1xf32>,
    return
  }
}

</mosaic_0001>

<llo_original>
// kernel: model_llm_forward.1
$region0: #{model_llm_forward.1}
  #allocation0 [shape = 'u32[]', space=smem, size = 0x4, offset = 0x4, fixed_abs, tag = 'smem constant byte address 0x4 - core index']
  #allocation1 [shape = 'u32[144,128]{1,0:T(1,128)}', space=vmem, size = 0x12000, scoped, tag = 'internal scratch']
  %s0 = inlined_call_operand.vmem [shape: s32[24,128], index: 0, kind: input, shape index: {}]
  %s1 = inlined_call_operand.hbm [shape: f32[608,128], index: 1, kind: input, shape index: {}]
  %s2 = inlined_call_operand.vmem [shape: f32[16,128], index: 2, kind: output, shape index: {0}]
  %s3 = inlined_call_operand.hbm [shape: f32[1,1], index: 3, kind: output, shape index: {1}]
  %4 = xla_tuple %s2, %s3
  %s5 = sld [smem:[#allocation0]]
  $region30: #{model_llm_forward.1} parent=0
    _
  %s7 = ssub.s32 1, %s5
  %s8 = scalar_select 0, %s7, %s5
  $region1: #{model_llm_forward.1} parent=0
    #allocation2 [shape = 'u8[311296]{0}', space=vmem, size = 0x4c000, scoped, tag = 'input window, operand 1, single buffered']
    #allocation3 [shape = 's32[1]{0}', space=sflag, size = 0x4, scoped, tag = 'scoped memory for model_llm_forward.1']
    #allocation4 [shape = 's32[1]{0}', space=sflag, size = 0x4, scoped, tag = 'scoped memory for model_llm_forward.1']
    #allocation5 [shape = 'u8[512]{0}', space=vmem, size = 0x400, scoped, tag = 'output window, operand 1, single buffered']
    %9 = vsyncpa [#allocation3], 0
    %10 = vsyncpa [#allocation4], 0
    // Predicated region
    $region2: #{model_llm_forward.1} parent=1 // pred_check
      _
    $region3: #{model_llm_forward.1} parent=1 // pred_check_branch
      %12 = sbr.rel (0) target = $region5
    $region4: #{model_llm_forward.1} parent=1 // pred_region
      _
    $region5: #{model_llm_forward.1} parent=1 // pred_fallthru
      _
    // Predicated region
    $region6: #{model_llm_forward.1} parent=1 // pred_check
      _
    $region7: #{model_llm_forward.1} parent=1 // pred_check_branch
      %14 = sbr.rel (0) target = $region9
    $region8: #{model_llm_forward.1} parent=1 // pred_region
      %s16 = ssub.s32 9728, 9728
      %17 = vsyncadd [#allocation3], %s16
      %s18 = sshll.u32 [#allocation2], 4
      %s19 = int_to_ptr.vmem [resolvable:$true] %s18
      %24 = dma.hbm_to_vmem [thread:$0]  %s1, 9728, %s19, [#allocation3], 128, 128, 8
    $region9: #{model_llm_forward.1} parent=1 // pred_fallthru
      _
    // Predicated region
    $region10: #{model_llm_forward.1} parent=1 // pred_check
      _
    $region11: #{model_llm_forward.1} parent=1 // pred_check_branch
      %26 = sbr.rel (0) target = $region13
    $region12: #{model_llm_forward.1} parent=1 // pred_region
      %27 = dma.done [#allocation3], 9728
    $region13: #{model_llm_forward.1} parent=1 // pred_fallthru
      _
    %v29 = vld [vmem:[%s0] sm:$0xff]
    %v30 = vld [vmem:[%s0 + $0x8] sm:$0xff]
    %v31 = vld [vmem:[%s0 + $0x10] sm:$0x1]
    %v32 = vld [vmem:[#allocation2] sm:$0xff]
    %v33 = vld [vmem:[#allocation2 + $0x8] sm:$0xff]
    %v34 = vld [vmem:[#allocation2 + $0x10] sm:$0xff]
    %v35 = vld [vmem:[#allocation2 + $0x18] sm:$0xff]
    %v36 = vld [vmem:[#allocation2 + $0x20] sm:$0xff]
    %v37 = vld [vmem:[#allocation2 + $0x28] sm:$0xff]
    %v38 = vld [vmem:[#allocation2 + $0x30] sm:$0xff]
    %v39 = vld [vmem:[#allocation2 + $0x38] sm:$0xff]
    %v40 = vld [vmem:[#allocation2 + $0x40] sm:$0xff]
    %v41 = vld [vmem:[#allocation2 + $0x48] sm:$0xff]
    %v42 = vld [vmem:[#allocation2 + $0x50] sm:$0xff]
    %v43 = vld [vmem:[#allocation2 + $0x58] sm:$0xff]
    %v44 = vld [vmem:[#allocation2 + $0x60] sm:$0xff]
    %v45 = vld [vmem:[#allocation2 + $0x68] sm:$0xff]
    %v46 = vld [vmem:[#allocation2 + $0x70] sm:$0xff]
    %v47 = vld [vmem:[#allocation2 + $0x78] sm:$0xff]
    %v48 = vpack.c.bf16 %v33, %v32
    %v49 = vpack.c.bf16 %v35, %v34
    %v50 = vpack.c.bf16 %v37, %v36
    %v51 = vpack.c.bf16 %v39, %v38
    %v52 = vpack.c.bf16 %v41, %v40
    %v53 = vpack.c.bf16 %v43, %v42
    %v54 = vpack.c.bf16 %v45, %v44
    %v55 = vpack.c.bf16 %v47, %v46
    %v56 = vld [vmem:[#allocation2 + $0x80] sm:$0xff]
    %v57 = vlaneseq
    %v58 = vand.u32 %v57, 127
    %59 = vset.pattern.permute.xlu0 0
    %60 = vperm.xlu0 %59, %v29
    %v61 = vpop.permute.xlu0 %60
    %62 = vset.pattern.permute.xlu0 0
    %63 = vperm.xlu0 %62, %v30
    %v64 = vpop.permute.xlu0 %63
    %vm65 = vcmp.eq.s32.totalorder %v58, %v61
    %vm66 = vcmp.eq.s32.totalorder %v58, %v64
    %v67 = vsel %vm65, 1, 0
    %v68 = vsel %vm66, 1, 0
    %v69 = vcvt.s32.f32 %v67
    %v70 = vcvt.s32.f32 %v68
    %v71 = vpack.c.bf16 %v70, %v69
    %72 = vmatprep.subr.bf16.mxu0 0
    %73 = vmatpush1.bf16.msra.mxu0 %v48
    %74 = vmatprep.subr.bf16.mxu0 0
    %75 = vmatpush1.bf16.msra.mxu0 %v49
    %76 = vmatprep.subr.bf16.mxu0 0
    %77 = vmatpush1.bf16.msra.mxu0 %v50
    %78 = vmatprep.subr.bf16.mxu0 0
    %79 = vmatpush1.bf16.msra.mxu0 %v51
    %80 = vmatprep.subr.bf16.mxu0 0
    %81 = vmatpush1.bf16.msra.mxu0 %v52
    %82 = vmatprep.subr.bf16.mxu0 0
    %83 = vmatpush1.bf16.msra.mxu0 %v53
    %84 = vmatprep.subr.bf16.mxu0 0
    %85 = vmatpush1.bf16.msra.mxu0 %v54
    %86 = vmatprep.subr.bf16.mxu0 0
    %87 = vmatpush1.bf16.msra.mxu0 %v55
    %88 = vmatprep.subr.bf16.mxu0 0
    %89 = vmatpush1.bf16.msra.mxu0 0
    %90 = vmatprep.subr.bf16.mxu0 0
    %91 = vmatpush1.bf16.msra.mxu0 0
    %92 = vmatprep.subr.bf16.mxu0 0
    %93 = vmatpush1.bf16.msra.mxu0 0
    %94 = vmatprep.subr.bf16.mxu0 0
    %95 = vmatpush1.bf16.msra.mxu0 0
    %96 = vmatprep.subr.bf16.mxu0 0
    %97 = vmatpush1.bf16.msra.mxu0 0
    %98 = vmatprep.subr.bf16.mxu0 0
    %99 = vmatpush1.bf16.msra.mxu0 0
    %100 = vmatprep.subr.bf16.mxu0 0
    %101 = vmatpush1.bf16.msra.mxu0 0
    %102 = vmatprep.subr.bf16.mxu0 0
    %103 = vmatpush1.bf16.msra.mxu0 0
    %104 = vmatprep.mubr.bf16.mxu0 0
    %105 = vmatmul.mubr.bf16.gmra.mrb[0].mxu0 %v71
    %v106 = vpop.f32.mrb[0].mxu0
    %v107 = vadd.f32 %v56, %v106
    %v108 = vpop.f32.mrb[0].mxu0
    %v109 = vpop.f32.mrb[0].mxu0
    %v110 = vadd.f32 %v56, %v109
    %v111 = vpop.f32.mrb[0].mxu0
    %112 = vdwg.mxu0
    %v113 = vlaneseq
    %v114 = vshrl.u32 %v113, 7
    %v115 = vadd.s32 %v114, 8
    %v116 = vshra.s32 %v114, 3
    %v117 = vshra.s32 %v115, 3
    %v118 = vshra.s32 %v58, 3
    %vm119 = vcmp.eq.s32.totalorder %v116, %v118
    %vm120 = vcmp.eq.s32.totalorder %v117, %v118
    %vm121 = vcmp.le.s32.totalorder %v58, %v114
    %vm122 = vcmp.le.s32.totalorder %v58, %v115
    %vm123 = vmand %vm119, %vm121
    %vm124 = vmand %vm120, %vm122
    %vm125 = vcmp.gt.s32.totalorder %v31, 0
    %v126 = vsel %vm125, 1, 0
    %v127 = vlaneseq
    %v128 = vshrl.u32 %v127, 7
    %v129 = vsub.s32 0, %v128
    %v130 = vrot.slane %v126, %v129
    %vm131 = vcmp.eq.s32.totalorder %v130, 1
    %vm132 = vmand %vm123, %vm131
    %vm133 = vmand %vm124, %vm131
    %v134 = vsel %vm132, 0.0, -1e+09
    %v135 = vsel %vm133, 0.0, -1e+09
    %138 = vrot.lane.b32.xlu0 %v134, 16
    %v139 = vpop.permute.xlu0 %138
    %140 = vrot.lane.b32.xlu0 %v135, 16
    %v141 = vpop.permute.xlu0 %140
    %144 = vrot.lane.b32.xlu0 %v134, 32
    %v145 = vpop.permute.xlu0 %144
    %146 = vrot.lane.b32.xlu0 %v135, 32
    %v147 = vpop.permute.xlu0 %146
    %150 = vrot.lane.b32.xlu0 %v134, 48
    %v151 = vpop.permute.xlu0 %150
    %152 = vrot.lane.b32.xlu0 %v135, 48
    %v153 = vpop.permute.xlu0 %152
    %vm156 = vcmask 130048
    %v157 = vsel %vm156, %v134, %v139
    %v158 = vsel %vm156, %v135, %v141
    %vm159 = vcmask 261120
    %v160 = vsel %vm159, %v157, %v145
    %v161 = vsel %vm159, %v158, %v147
    %vm162 = vcmask 392192
    %v163 = vsel %vm162, %v160, %v151
    %v164 = vsel %vm162, %v161, %v153
    %v165 = vadd.s32 %v114, 16
    %v166 = vadd.s32 %v114, 24
    %v167 = vadd.s32 %v114, 32
    %v168 = vadd.s32 %v114, 40
    %v169 = vadd.s32 %v114, 48
    %v170 = vadd.s32 %v114, 56
    %v171 = vshra.s32 %v114, 4
    %v172 = vshra.s32 %v115, 4
    %v173 = vshra.s32 %v165, 4
    %v174 = vshra.s32 %v166, 4
    %v175 = vshra.s32 %v167, 4
    %v176 = vshra.s32 %v168, 4
    %v177 = vshra.s32 %v169, 4
    %v178 = vshra.s32 %v170, 4
    %vm179 = vcmp.eq.s32.totalorder %v171, %v118
    %vm180 = vcmp.eq.s32.totalorder %v172, %v118
    %vm181 = vcmp.eq.s32.totalorder %v173, %v118
    %vm182 = vcmp.eq.s32.totalorder %v174, %v118
    %vm183 = vcmp.eq.s32.totalorder %v175, %v118
    %vm184 = vcmp.eq.s32.totalorder %v176, %v118
    %vm185 = vcmp.eq.s32.totalorder %v177, %v118
    %vm186 = vcmp.eq.s32.totalorder %v178, %v118
    %v187 = vsel %vm179, 1, 0
    %v188 = vsel %vm180, 1, 0
    %v189 = vsel %vm181, 1, 0
    %v190 = vsel %vm182, 1, 0
    %v191 = vsel %vm183, 1, 0
    %v192 = vsel %vm184, 1, 0
    %v193 = vsel %vm185, 1, 0
    %v194 = vsel %vm186, 1, 0
    %v195 = vcvt.s32.f32 %v187
    %v196 = vcvt.s32.f32 %v188
    %v197 = vcvt.s32.f32 %v189
    %v198 = vcvt.s32.f32 %v190
    %v199 = vcvt.s32.f32 %v191
    %v200 = vcvt.s32.f32 %v192
    %v201 = vcvt.s32.f32 %v193
    %v202 = vcvt.s32.f32 %v194
    %v203 = vpack.c.bf16 %v196, %v195
    %v204 = vpack.c.bf16 %v198, %v197
    %v205 = vpack.c.bf16 %v200, %v199
    %v206 = vpack.c.bf16 %v202, %v201
    %v207 = vld [vmem:[#allocation2 + $0x8a] sm:$0x1]
    %v208 = vld [vmem:[#allocation2 + $0x8b] sm:$0x1]
    %v209 = vld [vmem:[#allocation2 + $0x8c] sm:$0x1]
    %v210 = vld [vmem:[#allocation2 + $0x8d] sm:$0x1]
    %v211 = vld [vmem:[#allocation2 + $0x8e] sm:$0x1]
    %v212 = vld [vmem:[#allocation2 + $0x8f] sm:$0x1]
    %v213 = vld [vmem:[#allocation2 + $0x90] sm:$0x1]
    %v214 = vld [vmem:[#allocation2 + $0x91] sm:$0x1]
    %v215 = vld [vmem:[#allocation2 + $0xa0] sm:$0xff]
    %v216 = vld [vmem:[#allocation2 + $0xa8] sm:$0xff]
    %v217 = vld [vmem:[#allocation2 + $0xb0] sm:$0xff]
    %v218 = vld [vmem:[#allocation2 + $0xb8] sm:$0xff]
    %v219 = vpack.c.bf16 %v216, %v215
    %v220 = vpack.c.bf16 %v218, %v217
    %v221 = vld [vmem:[#allocation2 + $0xc0] sm:$0xff]
    %v222 = vld [vmem:[#allocation2 + $0xc8] sm:$0xff]
    %v223 = vld [vmem:[#allocation2 + $0xd0] sm:$0xff]
    %v224 = vld [vmem:[#allocation2 + $0xd8] sm:$0xff]
    %v225 = vpack.c.bf16 %v222, %v221
    %v226 = vpack.c.bf16 %v224, %v223
    %v227 = vld [vmem:[#allocation2 + $0xe0] sm:$0xff]
    %v228 = vld [vmem:[#allocation2 + $0xe8] sm:$0xff]
    %v229 = vld [vmem:[#allocation2 + $0xf0] sm:$0xff]
    %v230 = vld [vmem:[#allocation2 + $0xf8] sm:$0xff]
    %v231 = vpack.c.bf16 %v228, %v227
    %v232 = vpack.c.bf16 %v230, %v229
    %v233 = vld [vmem:[#allocation2 + $0x100] sm:$0xff]
    %v234 = vld [vmem:[#allocation2 + $0x108] sm:$0xff]
    %v235 = vld [vmem:[#allocation2 + $0x110] sm:$0xff]
    %v236 = vld [vmem:[#allocation2 + $0x118] sm:$0xff]
    %v237 = vld [vmem:[#allocation2 + $0x120] sm:$0xff]
    %v238 = vld [vmem:[#allocation2 + $0x128] sm:$0xff]
    %v239 = vld [vmem:[#allocation2 + $0x130] sm:$0xff]
    %v240 = vld [vmem:[#allocation2 + $0x138] sm:$0xff]
    %v241 = vld [vmem:[#allocation2 + $0x140] sm:$0xff]
    %v242 = vld [vmem:[#allocation2 + $0x148] sm:$0xff]
    %v243 = vld [vmem:[#allocation2 + $0x150] sm:$0xff]
    %v244 = vld [vmem:[#allocation2 + $0x158] sm:$0xff]
    %v245 = vld [vmem:[#allocation2 + $0x160] sm:$0xff]
    %v246 = vld [vmem:[#allocation2 + $0x168] sm:$0xff]
    %v247 = vld [vmem:[#allocation2 + $0x170] sm:$0xff]
    %v248 = vld [vmem:[#allocation2 + $0x178] sm:$0xff]
    %v249 = vpack.c.bf16 %v234, %v233
    %v250 = vpack.c.bf16 %v236, %v235
    %v251 = vpack.c.bf16 %v238, %v237
    %v252 = vpack.c.bf16 %v240, %v239
    %v253 = vpack.c.bf16 %v242, %v241
    %v254 = vpack.c.bf16 %v244, %v243
    %v255 = vpack.c.bf16 %v246, %v245
    %v256 = vpack.c.bf16 %v248, %v247
    %v257 = vsel %vm159, %v107, 0.0
    %258 = vadd.xlane.f32.xlu0 %v257
    %v259 = vpop.xlane.xlu0 %258
    %v260 = vsel %vm159, %v110, 0.0
    %261 = vadd.xlane.f32.xlu0 %v260
    %v262 = vpop.xlane.xlu0 %261
    %v263 = vrcp.pop 32.0
    %v264 = vmul.f32 %v259, %v263
    %v265 = vmul.f32 %v262, %v263
    %v266 = vsub.f32 %v107, %v264
    %v267 = vsub.f32 %v110, %v265
    %v268 = vmul.f32 %v266, %v266
    %v269 = vmul.f32 %v267, %v267
    %v270 = vsel %vm159, %v268, 0.0
    %271 = vadd.xlane.f32.xlu0 %v270
    %v272 = vpop.xlane.xlu0 %271
    %v273 = vsel %vm159, %v269, 0.0
    %274 = vadd.xlane.f32.xlu0 %v273
    %v275 = vpop.xlane.xlu0 %274
    %v276 = vmul.f32 %v272, %v263
    %v277 = vmul.f32 %v275, %v263
    %v278 = vadd.f32 %v276, 1e-05
    %v279 = vadd.f32 %v277, 1e-05
    %v280 = vrsqrt.pop %v278
    %v281 = vrsqrt.pop %v279
    %v282 = vmul.f32 %v266, %v280
    %v283 = vmul.f32 %v267, %v281
    %v284 = vlaneseq
    %v285 = vshrl.u32 %v284, 7
    %v286 = vsub.s32 0, %v285
    %v287 = vrot.slane %v207, %v286
    %v288 = vmul.f32 %v282, %v287
    %v289 = vmul.f32 %v283, %v287
    %v290 = vlaneseq
    %v291 = vshrl.u32 %v290, 7
    %v292 = vsub.s32 0, %v291
    %v293 = vrot.slane %v208, %v292
    %v294 = vadd.f32 %v288, %v293
    %v295 = vadd.f32 %v289, %v293
    %v296 = vpack.c.bf16 %v295, %v294
    %v297 = vlaneseq
    %v298 = vshrl.u32 %v297, 7
    %v299 = vsub.s32 0, %v298
    %v300 = vrot.slane %v209, %v299
    %v302 = vsel %vm159, %v296, 0
    %304 = vmatprep.subr.bf16.mxu0 0
    %305 = vmatpush1.bf16.msra.mxu0 %v219
    %306 = vmatprep.subr.bf16.mxu0 0
    %307 = vmatpush1.bf16.msra.mxu0 %v220
    %308 = vmatprep.subr.bf16.mxu0 0
    %309 = vmatpush1.bf16.msra.mxu0 0
    %310 = vmatprep.subr.bf16.mxu0 0
    %311 = vmatpush1.bf16.msra.mxu0 0
    %312 = vmatprep.subr.bf16.mxu0 0
    %313 = vmatpush1.bf16.msra.mxu0 0
    %314 = vmatprep.subr.bf16.mxu0 0
    %315 = vmatpush1.bf16.msra.mxu0 0
    %316 = vmatprep.subr.bf16.mxu0 0
    %317 = vmatpush1.bf16.msra.mxu0 0
    %318 = vmatprep.subr.bf16.mxu0 0
    %319 = vmatpush1.bf16.msra.mxu0 0
    %320 = vmatprep.subr.bf16.mxu0 0
    %321 = vmatpush1.bf16.msra.mxu0 0
    %322 = vmatprep.subr.bf16.mxu0 0
    %323 = vmatpush1.bf16.msra.mxu0 0
    %324 = vmatprep.subr.bf16.mxu0 0
    %325 = vmatpush1.bf16.msra.mxu0 0
    %326 = vmatprep.subr.bf16.mxu0 0
    %327 = vmatpush1.bf16.msra.mxu0 0
    %328 = vmatprep.subr.bf16.mxu0 0
    %329 = vmatpush1.bf16.msra.mxu0 0
    %330 = vmatprep.subr.bf16.mxu0 0
    %331 = vmatpush1.bf16.msra.mxu0 0
    %332 = vmatprep.subr.bf16.mxu0 0
    %333 = vmatpush1.bf16.msra.mxu0 0
    %334 = vmatprep.subr.bf16.mxu0 0
    %335 = vmatpush1.bf16.msra.mxu0 0
    %336 = vmatprep.mubr.bf16.mxu0 0
    %337 = vmatmul.mubr.bf16.gmra.mrb[0].mxu0 %v302
    %v338 = vpop.f32.mrb[0].mxu0
    %v339 = vadd.f32 %v300, %v338
    %v340 = vpop.f32.mrb[0].mxu0
    %v341 = vpop.f32.mrb[0].mxu0
    %v342 = vadd.f32 %v300, %v341
    %v343 = vpop.f32.mrb[0].mxu0
    %344 = vdwg.mxu0
    %353 = vrot.lane.b32.xlu0 %v195, 32
    %v354 = vpop.permute.xlu0 %353
    %355 = vrot.lane.b32.xlu0 %v196, 32
    %v356 = vpop.permute.xlu0 %355
    %357 = vrot.lane.b32.xlu0 %v197, 32
    %v358 = vpop.permute.xlu0 %357
    %359 = vrot.lane.b32.xlu0 %v198, 32
    %v360 = vpop.permute.xlu0 %359
    %361 = vrot.lane.b32.xlu0 %v199, 32
    %v362 = vpop.permute.xlu0 %361
    %363 = vrot.lane.b32.xlu0 %v200, 32
    %v364 = vpop.permute.xlu0 %363
    %365 = vrot.lane.b32.xlu0 %v201, 32
    %v366 = vpop.permute.xlu0 %365
    %367 = vrot.lane.b32.xlu0 %v202, 32
    %v368 = vpop.permute.xlu0 %367
    %v377 = vmul.f32 %v339, %v354
    %v378 = vmul.f32 %v342, %v356
    %v379 = vmul.f32 %v339, %v358
    %v380 = vmul.f32 %v342, %v360
    %v381 = vmul.f32 %v339, %v362
    %v382 = vmul.f32 %v342, %v364
    %v383 = vmul.f32 %v339, %v366
    %v384 = vmul.f32 %v342, %v368
    %v385 = vpack.c.bf16 %v378, %v377
    %v386 = vpack.c.bf16 %v380, %v379
    %v387 = vpack.c.bf16 %v382, %v381
    %v388 = vpack.c.bf16 %v384, %v383
    %389 = vrot.lane.b32.xlu0 %v195, 64
    %v390 = vpop.permute.xlu0 %389
    %391 = vrot.lane.b32.xlu0 %v196, 64
    %v392 = vpop.permute.xlu0 %391
    %393 = vrot.lane.b32.xlu0 %v197, 64
    %v394 = vpop.permute.xlu0 %393
    %395 = vrot.lane.b32.xlu0 %v198, 64
    %v396 = vpop.permute.xlu0 %395
    %397 = vrot.lane.b32.xlu0 %v199, 64
    %v398 = vpop.permute.xlu0 %397
    %399 = vrot.lane.b32.xlu0 %v200, 64
    %v400 = vpop.permute.xlu0 %399
    %401 = vrot.lane.b32.xlu0 %v201, 64
    %v402 = vpop.permute.xlu0 %401
    %403 = vrot.lane.b32.xlu0 %v202, 64
    %v404 = vpop.permute.xlu0 %403
    %v413 = vmul.f32 %v339, %v390
    %v414 = vmul.f32 %v342, %v392
    %v415 = vmul.f32 %v339, %v394
    %v416 = vmul.f32 %v342, %v396
    %v417 = vmul.f32 %v339, %v398
    %v418 = vmul.f32 %v342, %v400
    %v419 = vmul.f32 %v339, %v402
    %v420 = vmul.f32 %v342, %v404
    %v421 = vpack.c.bf16 %v414, %v413
    %v422 = vpack.c.bf16 %v416, %v415
    %v423 = vpack.c.bf16 %v418, %v417
    %v424 = vpack.c.bf16 %v420, %v419
    %v425 = vpack.c.bf16 %v342, %v339
    %430 = vrot.lane.b32.xlu0 %v385, 96
    %v431 = vpop.permute.xlu0 %430
    %432 = vrot.lane.b32.xlu0 %v386, 96
    %v433 = vpop.permute.xlu0 %432
    %434 = vrot.lane.b32.xlu0 %v387, 96
    %v435 = vpop.permute.xlu0 %434
    %436 = vrot.lane.b32.xlu0 %v388, 96
    %v437 = vpop.permute.xlu0 %436
    %v439 = vsel %vm159, %v425, 0
    %v442 = vsel %vm159, %v431, 0
    %v445 = vsel %vm159, %v433, 0
    %v448 = vsel %vm159, %v435, 0
    %v451 = vsel %vm159, %v437, 0
    %453 = vmatprep.subr.bf16.mxu0 0
    %454 = vmatpush1.bf16.xpose.msra.mxu0 %v442
    %455 = vmatprep.subr.bf16.mxu0 0
    %456 = vmatpush1.bf16.xpose.msra.mxu0 %v445
    %457 = vmatprep.subr.bf16.mxu0 0
    %458 = vmatpush1.bf16.xpose.msra.mxu0 %v448
    %459 = vmatprep.subr.bf16.mxu0 0
    %460 = vmatpush1.bf16.xpose.msra.mxu0 %v451
    %461 = vmatprep.subr.bf16.mxu0 0
    %462 = vmatpush1.bf16.xpose.msra.mxu0 0
    %463 = vmatprep.subr.bf16.mxu0 0
    %464 = vmatpush1.bf16.xpose.msra.mxu0 0
    %465 = vmatprep.subr.bf16.mxu0 0
    %466 = vmatpush1.bf16.xpose.msra.mxu0 0
    %467 = vmatprep.subr.bf16.mxu0 0
    %468 = vmatpush1.bf16.xpose.msra.mxu0 0
    %469 = vmatprep.subr.bf16.mxu0 0
    %470 = vmatpush1.bf16.xpose.msra.mxu0 0
    %471 = vmatprep.subr.bf16.mxu0 0
    %472 = vmatpush1.bf16.xpose.msra.mxu0 0
    %473 = vmatprep.subr.bf16.mxu0 0
    %474 = vmatpush1.bf16.xpose.msra.mxu0 0
    %475 = vmatprep.subr.bf16.mxu0 0
    %476 = vmatpush1.bf16.xpose.msra.mxu0 0
    %477 = vmatprep.subr.bf16.mxu0 0
    %478 = vmatpush1.bf16.xpose.msra.mxu0 0
    %479 = vmatprep.subr.bf16.mxu0 0
    %480 = vmatpush1.bf16.xpose.msra.mxu0 0
    %481 = vmatprep.subr.bf16.mxu0 0
    %482 = vmatpush1.bf16.xpose.msra.mxu0 0
    %483 = vmatprep.subr.bf16.mxu0 0
    %484 = vmatpush1.bf16.xpose.msra.mxu0 0
    %485 = vmatprep.mubr.bf16.mxu0 0
    %486 = vmatmul.mubr.bf16.gmra.mrb[0].mxu0 %v439
    %v487 = vpop.f32.mrb[0].mxu0
    %v488 = vadd.f32 0.0, %v487
    %v489 = vpop.f32.mrb[0].mxu0
    %v490 = vpop.f32.mrb[0].mxu0
    %v491 = vadd.f32 0.0, %v490
    %v492 = vpop.f32.mrb[0].mxu0
    %493 = vdwg.mxu0
    %v494 = vmul.f32 %v488, 0.35355338
    %v495 = vmul.f32 %v491, 0.35355338
    %v496 = vadd.f32 %v494, %v163
    %v497 = vadd.f32 %v495, %v164
    %vm498 = vcmask 523264
    %v499 = vsel %vm498, %v496, -inf
    %500 = vmax.xlane.f32.xlu0 %v499
    %v501 = vpop.xlane.xlu0 %500
    %v502 = vsel %vm498, %v497, -inf
    %503 = vmax.xlane.f32.xlu0 %v502
    %v504 = vpop.xlane.xlu0 %503
    %v505 = vsub.f32 %v496, %v501
    %v506 = vsub.f32 %v497, %v504
    %v507 = vmul.f32 %v505, 1.442695
    %v508 = vpow.pop %v507
    %v509 = vmul.f32 %v506, 1.442695
    %v510 = vpow.pop %v509
    %v511 = vpack.c.bf16 %v510, %v508
    %516 = vrot.lane.b32.xlu0 %v421, 64
    %v517 = vpop.permute.xlu0 %516
    %518 = vrot.lane.b32.xlu0 %v422, 64
    %v519 = vpop.permute.xlu0 %518
    %520 = vrot.lane.b32.xlu0 %v423, 64
    %v521 = vpop.permute.xlu0 %520
    %522 = vrot.lane.b32.xlu0 %v424, 64
    %v523 = vpop.permute.xlu0 %522
    %v529 = vsel %vm498, %v511, 0
    %531 = vmatprep.subr.bf16.mxu0 0
    %532 = vmatpush1.bf16.msra.mxu0 %v517
    %533 = vmatprep.subr.bf16.mxu0 0
    %534 = vmatpush1.bf16.msra.mxu0 %v519
    %535 = vmatprep.subr.bf16.mxu0 0
    %536 = vmatpush1.bf16.msra.mxu0 %v521
    %537 = vmatprep.subr.bf16.mxu0 0
    %538 = vmatpush1.bf16.msra.mxu0 %v523
    %539 = vmatprep.subr.bf16.mxu0 0
    %540 = vmatpush1.bf16.msra.mxu0 0
    %541 = vmatprep.subr.bf16.mxu0 0
    %542 = vmatpush1.bf16.msra.mxu0 0
    %543 = vmatprep.subr.bf16.mxu0 0
    %544 = vmatpush1.bf16.msra.mxu0 0
    %545 = vmatprep.subr.bf16.mxu0 0
    %546 = vmatpush1.bf16.msra.mxu0 0
    %547 = vmatprep.subr.bf16.mxu0 0
    %548 = vmatpush1.bf16.msra.mxu0 0
    %549 = vmatprep.subr.bf16.mxu0 0
    %550 = vmatpush1.bf16.msra.mxu0 0
    %551 = vmatprep.subr.bf16.mxu0 0
    %552 = vmatpush1.bf16.msra.mxu0 0
    %553 = vmatprep.subr.bf16.mxu0 0
    %554 = vmatpush1.bf16.msra.mxu0 0
    %555 = vmatprep.subr.bf16.mxu0 0
    %556 = vmatpush1.bf16.msra.mxu0 0
    %557 = vmatprep.subr.bf16.mxu0 0
    %558 = vmatpush1.bf16.msra.mxu0 0
    %559 = vmatprep.subr.bf16.mxu0 0
    %560 = vmatpush1.bf16.msra.mxu0 0
    %561 = vmatprep.subr.bf16.mxu0 0
    %562 = vmatpush1.bf16.msra.mxu0 0
    %563 = vmatprep.mubr.bf16.mxu0 0
    %564 = vmatmul.mubr.bf16.gmra.mrb[0].mxu0 %v529
    %v565 = vpop.f32.mrb[0].mxu0
    %v566 = vadd.f32 0.0, %v565
    %v567 = vpop.f32.mrb[0].mxu0
    %v568 = vpop.f32.mrb[0].mxu0
    %v569 = vadd.f32 0.0, %v568
    %v570 = vpop.f32.mrb[0].mxu0
    %571 = vdwg.mxu0
    %572 = vmatprep.subr.bf16.mxu0 0
    %573 = vmatpush1.bf16.msra.mxu0 %v203
    %574 = vmatprep.subr.bf16.mxu0 0
    %575 = vmatpush1.bf16.msra.mxu0 %v204
    %576 = vmatprep.subr.bf16.mxu0 0
    %577 = vmatpush1.bf16.msra.mxu0 %v205
    %578 = vmatprep.subr.bf16.mxu0 0
    %579 = vmatpush1.bf16.msra.mxu0 %v206
    %580 = vmatprep.subr.bf16.mxu0 0
    %581 = vmatpush1.bf16.msra.mxu0 0
    %582 = vmatprep.subr.bf16.mxu0 0
    %583 = vmatpush1.bf16.msra.mxu0 0
    %584 = vmatprep.subr.bf16.mxu0 0
    %585 = vmatpush1.bf16.msra.mxu0 0
    %586 = vmatprep.subr.bf16.mxu0 0
    %587 = vmatpush1.bf16.msra.mxu0 0
    %588 = vmatprep.subr.bf16.mxu0 0
    %589 = vmatpush1.bf16.msra.mxu0 0
    %590 = vmatprep.subr.bf16.mxu0 0
    %591 = vmatpush1.bf16.msra.mxu0 0
    %592 = vmatprep.subr.bf16.mxu0 0
    %593 = vmatpush1.bf16.msra.mxu0 0
    %594 = vmatprep.subr.bf16.mxu0 0
    %595 = vmatpush1.bf16.msra.mxu0 0
    %596 = vmatprep.subr.bf16.mxu0 0
    %597 = vmatpush1.bf16.msra.mxu0 0
    %598 = vmatprep.subr.bf16.mxu0 0
    %599 = vmatpush1.bf16.msra.mxu0 0
    %600 = vmatprep.subr.bf16.mxu0 0
    %601 = vmatpush1.bf16.msra.mxu0 0
    %602 = vmatprep.subr.bf16.mxu0 0
    %603 = vmatpush1.bf16.msra.mxu0 0
    %604 = vmatprep.mubr.bf16.mxu0 0
    %605 = vmatmul.mubr.bf16.gmra.mrb[0].mxu0 %v529
    %v606 = vpop.f32.mrb[0].mxu0
    %v607 = vadd.f32 0.0, %v606
    %v608 = vpop.f32.mrb[0].mxu0
    %v609 = vpop.f32.mrb[0].mxu0
    %v610 = vadd.f32 0.0, %v609
    %v611 = vpop.f32.mrb[0].mxu0
    %612 = vdwg.mxu0
    %v613 = vmax.f32 %v607, 1e-30
    %v614 = vmax.f32 %v610, 1e-30
    %v615 = vrcp.pop %v613
    %v616 = vrcp.pop %v614
    %v617 = vmul.f32 %v566, %v615
    %v618 = vmul.f32 %v569, %v616
    %v619 = vpack.c.bf16 %v618, %v617
    %v621 = vsel %vm159, %v619, 0
    %623 = vmatprep.subr.bf16.mxu0 0
    %624 = vmatpush1.bf16.msra.mxu0 %v225
    %625 = vmatprep.subr.bf16.mxu0 0
    %626 = vmatpush1.bf16.msra.mxu0 %v226
    %627 = vmatprep.subr.bf16.mxu0 0
    %628 = vmatpush1.bf16.msra.mxu0 0
    %629 = vmatprep.subr.bf16.mxu0 0
    %630 = vmatpush1.bf16.msra.mxu0 0
    %631 = vmatprep.subr.bf16.mxu0 0
    %632 = vmatpush1.bf16.msra.mxu0 0
    %633 = vmatprep.subr.bf16.mxu0 0
    %634 = vmatpush1.bf16.msra.mxu0 0
    %635 = vmatprep.subr.bf16.mxu0 0
    %636 = vmatpush1.bf16.msra.mxu0 0
    %637 = vmatprep.subr.bf16.mxu0 0
    %638 = vmatpush1.bf16.msra.mxu0 0
    %639 = vmatprep.subr.bf16.mxu0 0
    %640 = vmatpush1.bf16.msra.mxu0 0
    %641 = vmatprep.subr.bf16.mxu0 0
    %642 = vmatpush1.bf16.msra.mxu0 0
    %643 = vmatprep.subr.bf16.mxu0 0
    %644 = vmatpush1.bf16.msra.mxu0 0
    %645 = vmatprep.subr.bf16.mxu0 0
    %646 = vmatpush1.bf16.msra.mxu0 0
    %647 = vmatprep.subr.bf16.mxu0 0
    %648 = vmatpush1.bf16.msra.mxu0 0
    %649 = vmatprep.subr.bf16.mxu0 0
    %650 = vmatpush1.bf16.msra.mxu0 0
    %651 = vmatprep.subr.bf16.mxu0 0
    %652 = vmatpush1.bf16.msra.mxu0 0
    %653 = vmatprep.subr.bf16.mxu0 0
    %654 = vmatpush1.bf16.msra.mxu0 0
    %655 = vmatprep.mubr.bf16.mxu0 0
    %656 = vmatmul.mubr.bf16.gmra.mrb[0].mxu0 %v621
    %v657 = vpop.f32.mrb[0].mxu0
    %v658 = vadd.f32 0.0, %v657
    %v659 = vpop.f32.mrb[0].mxu0
    %v660 = vpop.f32.mrb[0].mxu0
    %v661 = vadd.f32 0.0, %v660
    %v662 = vpop.f32.mrb[0].mxu0
    %663 = vdwg.mxu0
    %v664 = vadd.f32 %v107, %v658
    %v665 = vadd.f32 %v110, %v661
    %v666 = vlaneseq
    %v667 = vshrl.u32 %v666, 7
    %v668 = vsub.s32 0, %v667
    %v669 = vrot.slane %v210, %v668
    %v670 = vadd.f32 %v664, %v669
    %v671 = vadd.f32 %v665, %v669
    %v672 = vsel %vm159, %v670, 0.0
    %673 = vadd.xlane.f32.xlu0 %v672
    %v674 = vpop.xlane.xlu0 %673
    %v675 = vsel %vm159, %v671, 0.0
    %676 = vadd.xlane.f32.xlu0 %v675
    %v677 = vpop.xlane.xlu0 %676
    %v678 = vmul.f32 %v674, %v263
    %v679 = vmul.f32 %v677, %v263
    %v680 = vsub.f32 %v670, %v678
    %v681 = vsub.f32 %v671, %v679
    %v682 = vmul.f32 %v680, %v680
    %v683 = vmul.f32 %v681, %v681
    %v684 = vsel %vm159, %v682, 0.0
    %685 = vadd.xlane.f32.xlu0 %v684
    %v686 = vpop.xlane.xlu0 %685
    %v687 = vsel %vm159, %v683, 0.0
    %688 = vadd.xlane.f32.xlu0 %v687
    %v689 = vpop.xlane.xlu0 %688
    %v690 = vmul.f32 %v686, %v263
    %v691 = vmul.f32 %v689, %v263
    %v692 = vadd.f32 %v690, 1e-05
    %v693 = vadd.f32 %v691, 1e-05
    %v694 = vrsqrt.pop %v692
    %v695 = vrsqrt.pop %v693
    %v696 = vmul.f32 %v680, %v694
    %v697 = vmul.f32 %v681, %v695
    %v698 = vlaneseq
    %v699 = vshrl.u32 %v698, 7
    %v700 = vsub.s32 0, %v699
    %v701 = vrot.slane %v211, %v700
    %v702 = vmul.f32 %v696, %v701
    %v703 = vmul.f32 %v697, %v701
    %v704 = vlaneseq
    %v705 = vshrl.u32 %v704, 7
    %v706 = vsub.s32 0, %v705
    %v707 = vrot.slane %v212, %v706
    %v708 = vadd.f32 %v702, %v707
    %v709 = vadd.f32 %v703, %v707
    %v710 = vpack.c.bf16 %v709, %v708
    %v711 = vlaneseq
    %v712 = vshrl.u32 %v711, 7
    %v713 = vsub.s32 0, %v712
    %v714 = vrot.slane %v213, %v713
    %v716 = vsel %vm159, %v710, 0
    %718 = vmatprep.subr.bf16.mxu0 0
    %719 = vmatpush1.bf16.msra.mxu0 %v231
    %720 = vmatprep.subr.bf16.mxu0 0
    %721 = vmatpush1.bf16.msra.mxu0 %v232
    %722 = vmatprep.subr.bf16.mxu0 0
    %723 = vmatpush1.bf16.msra.mxu0 0
    %724 = vmatprep.subr.bf16.mxu0 0
    %725 = vmatpush1.bf16.msra.mxu0 0
    %726 = vmatprep.subr.bf16.mxu0 0
    %727 = vmatpush1.bf16.msra.mxu0 0
    %728 = vmatprep.subr.bf16.mxu0 0
    %729 = vmatpush1.bf16.msra.mxu0 0
    %730 = vmatprep.subr.bf16.mxu0 0
    %731 = vmatpush1.bf16.msra.mxu0 0
    %732 = vmatprep.subr.bf16.mxu0 0
    %733 = vmatpush1.bf16.msra.mxu0 0
    %734 = vmatprep.subr.bf16.mxu0 0
    %735 = vmatpush1.bf16.msra.mxu0 0
    %736 = vmatprep.subr.bf16.mxu0 0
    %737 = vmatpush1.bf16.msra.mxu0 0
    %738 = vmatprep.subr.bf16.mxu0 0
    %739 = vmatpush1.bf16.msra.mxu0 0
    %740 = vmatprep.subr.bf16.mxu0 0
    %741 = vmatpush1.bf16.msra.mxu0 0
    %742 = vmatprep.subr.bf16.mxu0 0
    %743 = vmatpush1.bf16.msra.mxu0 0
    %744 = vmatprep.subr.bf16.mxu0 0
    %745 = vmatpush1.bf16.msra.mxu0 0
    %746 = vmatprep.subr.bf16.mxu0 0
    %747 = vmatpush1.bf16.msra.mxu0 0
    %748 = vmatprep.subr.bf16.mxu0 0
    %749 = vmatpush1.bf16.msra.mxu0 0
    %750 = vmatprep.mubr.bf16.mxu0 0
    %751 = vmatmul.mubr.bf16.gmra.mrb[0].mxu0 %v716
    %v752 = vpop.f32.mrb[0].mxu0
    %v753 = vadd.f32 %v714, %v752
    %v754 = vpop.f32.mrb[0].mxu0
    %v755 = vpop.f32.mrb[0].mxu0
    %v756 = vadd.f32 %v714, %v755
    %v757 = vpop.f32.mrb[0].mxu0
    %758 = vdwg.mxu0
    %v759 = vmul.f32 %v753, 0.5
    %v760 = vmul.f32 %v756, 0.5
    %v761 = vmul.f32 %v753, 0.044715
    %v762 = vmul.f32 %v756, 0.044715
    %v763 = vmul.f32 %v761, %v753
    %v764 = vmul.f32 %v762, %v756
    %v765 = vmul.f32 %v763, %v753
    %v766 = vmul.f32 %v764, %v756
    %v767 = vadd.f32 %v753, %v765
    %v768 = vadd.f32 %v756, %v766
    %v769 = vmul.f32 %v767, 0.7978846
    %v770 = vmul.f32 %v768, 0.7978846
    %v771 = vtanh.pop %v769
    %v772 = vtanh.pop %v770
    %v773 = vadd.f32 %v771, 1.0
    %v774 = vadd.f32 %v772, 1.0
    %v775 = vmul.f32 %v759, %v773
    %v776 = vmul.f32 %v760, %v774
    %v777 = vpack.c.bf16 %v776, %v775
    %778 = vmatprep.subr.bf16.mxu0 0
    %779 = vmatpush1.bf16.msra.mxu0 %v249
    %780 = vmatprep.subr.bf16.mxu0 0
    %781 = vmatpush1.bf16.msra.mxu0 %v250
    %782 = vmatprep.subr.bf16.mxu0 0
    %783 = vmatpush1.bf16.msra.mxu0 %v251
    %784 = vmatprep.subr.bf16.mxu0 0
    %785 = vmatpush1.bf16.msra.mxu0 %v252
    %786 = vmatprep.subr.bf16.mxu0 0
    %787 = vmatpush1.bf16.msra.mxu0 %v253
    %788 = vmatprep.subr.bf16.mxu0 0
    %789 = vmatpush1.bf16.msra.mxu0 %v254
    %790 = vmatprep.subr.bf16.mxu0 0
    %791 = vmatpush1.bf16.msra.mxu0 %v255
    %792 = vmatprep.subr.bf16.mxu0 0
    %793 = vmatpush1.bf16.msra.mxu0 %v256
    %794 = vmatprep.subr.bf16.mxu0 0
    %795 = vmatpush1.bf16.msra.mxu0 0
    %796 = vmatprep.subr.bf16.mxu0 0
    %797 = vmatpush1.bf16.msra.mxu0 0
    %798 = vmatprep.subr.bf16.mxu0 0
    %799 = vmatpush1.bf16.msra.mxu0 0
    %800 = vmatprep.subr.bf16.mxu0 0
    %801 = vmatpush1.bf16.msra.mxu0 0
    %802 = vmatprep.subr.bf16.mxu0 0
    %803 = vmatpush1.bf16.msra.mxu0 0
    %804 = vmatprep.subr.bf16.mxu0 0
    %805 = vmatpush1.bf16.msra.mxu0 0
    %806 = vmatprep.subr.bf16.mxu0 0
    %807 = vmatpush1.bf16.msra.mxu0 0
    %808 = vmatprep.subr.bf16.mxu0 0
    %809 = vmatpush1.bf16.msra.mxu0 0
    %810 = vmatprep.mubr.bf16.mxu0 0
    %811 = vmatmul.mubr.bf16.gmra.mrb[0].mxu0 %v777
    %v812 = vpop.f32.mrb[0].mxu0
    %v813 = vadd.f32 0.0, %v812
    %v814 = vpop.f32.mrb[0].mxu0
    %v815 = vpop.f32.mrb[0].mxu0
    %v816 = vadd.f32 0.0, %v815
    %v817 = vpop.f32.mrb[0].mxu0
    %818 = vdwg.mxu0
    %v819 = vadd.f32 %v670, %v813
    %v820 = vadd.f32 %v671, %v816
    %v821 = vlaneseq
    %v822 = vshrl.u32 %v821, 7
    %v823 = vsub.s32 0, %v822
    %v824 = vrot.slane %v214, %v823
    %v825 = vadd.f32 %v819, %v824
    %v826 = vadd.f32 %v820, %v824
    %v827 = vld [vmem:[#allocation2 + $0x92] sm:$0x1]
    %v828 = vld [vmem:[#allocation2 + $0x93] sm:$0x1]
    %v829 = vld [vmem:[#allocation2 + $0x94] sm:$0x1]
    %v830 = vld [vmem:[#allocation2 + $0x95] sm:$0x1]
    %v831 = vld [vmem:[#allocation2 + $0x96] sm:$0x1]
    %v832 = vld [vmem:[#allocation2 + $0x97] sm:$0x1]
    %v833 = vld [vmem:[#allocation2 + $0x98] sm:$0x1]
    %v834 = vld [vmem:[#allocation2 + $0x99] sm:$0x1]
    %v835 = vld [vmem:[#allocation2 + $0x180] sm:$0xff]
    %v836 = vld [vmem:[#allocation2 + $0x188] sm:$0xff]
    %v837 = vld [vmem:[#allocation2 + $0x190] sm:$0xff]
    %v838 = vld [vmem:[#allocation2 + $0x198] sm:$0xff]
    %v839 = vpack.c.bf16 %v836, %v835
    %v840 = vpack.c.bf16 %v838, %v837
    %v841 = vld [vmem:[#allocation2 + $0x1a0] sm:$0xff]
    %v842 = vld [vmem:[#allocation2 + $0x1a8] sm:$0xff]
    %v843 = vld [vmem:[#allocation2 + $0x1b0] sm:$0xff]
    %v844 = vld [vmem:[#allocation2 + $0x1b8] sm:$0xff]
    %v845 = vpack.c.bf16 %v842, %v841
    %v846 = vpack.c.bf16 %v844, %v843
    %v847 = vld [vmem:[#allocation2 + $0x1c0] sm:$0xff]
    %v848 = vld [vmem:[#allocation2 + $0x1c8] sm:$0xff]
    %v849 = vld [vmem:[#allocation2 + $0x1d0] sm:$0xff]
    %v850 = vld [vmem:[#allocation2 + $0x1d8] sm:$0xff]
    %v851 = vpack.c.bf16 %v848, %v847
    %v852 = vpack.c.bf16 %v850, %v849
    %v853 = vld [vmem:[#allocation2 + $0x1e0] sm:$0xff]
    %v854 = vld [vmem:[#allocation2 + $0x1e8] sm:$0xff]
    %v855 = vld [vmem:[#allocation2 + $0x1f0] sm:$0xff]
    %v856 = vld [vmem:[#allocation2 + $0x1f8] sm:$0xff]
    %v857 = vld [vmem:[#allocation2 + $0x200] sm:$0xff]
    %v858 = vld [vmem:[#allocation2 + $0x208] sm:$0xff]
    %v859 = vld [vmem:[#allocation2 + $0x210] sm:$0xff]
    %v860 = vld [vmem:[#allocation2 + $0x218] sm:$0xff]
    %v861 = vld [vmem:[#allocation2 + $0x220] sm:$0xff]
    %v862 = vld [vmem:[#allocation2 + $0x228] sm:$0xff]
    %v863 = vld [vmem:[#allocation2 + $0x230] sm:$0xff]
    %v864 = vld [vmem:[#allocation2 + $0x238] sm:$0xff]
    %v865 = vld [vmem:[#allocation2 + $0x240] sm:$0xff]
    %v866 = vld [vmem:[#allocation2 + $0x248] sm:$0xff]
    %v867 = vld [vmem:[#allocation2 + $0x250] sm:$0xff]
    %v868 = vld [vmem:[#allocation2 + $0x258] sm:$0xff]
    %v869 = vpack.c.bf16 %v854, %v853
    %v870 = vpack.c.bf16 %v856, %v855
    %v871 = vpack.c.bf16 %v858, %v857
    %v872 = vpack.c.bf16 %v860, %v859
    %v873 = vpack.c.bf16 %v862, %v861
    %v874 = vpack.c.bf16 %v864, %v863
    %v875 = vpack.c.bf16 %v866, %v865
    %v876 = vpack.c.bf16 %v868, %v867
    %v877 = vsel %vm159, %v825, 0.0
    %878 = vadd.xlane.f32.xlu0 %v877
    %v879 = vpop.xlane.xlu0 %878
    %v880 = vsel %vm159, %v826, 0.0
    %881 = vadd.xlane.f32.xlu0 %v880
    %v882 = vpop.xlane.xlu0 %881
    %v883 = vmul.f32 %v879, %v263
    %v884 = vmul.f32 %v882, %v263
    %v885 = vsub.f32 %v825, %v883
    %v886 = vsub.f32 %v826, %v884
    %v887 = vmul.f32 %v885, %v885
    %v888 = vmul.f32 %v886, %v886
    %v889 = vsel %vm159, %v887, 0.0
    %890 = vadd.xlane.f32.xlu0 %v889
    %v891 = vpop.xlane.xlu0 %890
    %v892 = vsel %vm159, %v888, 0.0
    %893 = vadd.xlane.f32.xlu0 %v892
    %v894 = vpop.xlane.xlu0 %893
    %v895 = vmul.f32 %v891, %v263
    %v896 = vmul.f32 %v894, %v263
    %v897 = vadd.f32 %v895, 1e-05
    %v898 = vadd.f32 %v896, 1e-05
    %v899 = vrsqrt.pop %v897
    %v900 = vrsqrt.pop %v898
    %v901 = vmul.f32 %v885, %v899
    %v902 = vmul.f32 %v886, %v900
    %v903 = vlaneseq
    %v904 = vshrl.u32 %v903, 7
    %v905 = vsub.s32 0, %v904
    %v906 = vrot.slane %v827, %v905
    %v907 = vmul.f32 %v901, %v906
    %v908 = vmul.f32 %v902, %v906
    %v909 = vlaneseq
    %v910 = vshrl.u32 %v909, 7
    %v911 = vsub.s32 0, %v910
    %v912 = vrot.slane %v828, %v911
    %v913 = vadd.f32 %v907, %v912
    %v914 = vadd.f32 %v908, %v912
    %v915 = vpack.c.bf16 %v914, %v913
    %v916 = vlaneseq
    %v917 = vshrl.u32 %v916, 7
    %v918 = vsub.s32 0, %v917
    %v919 = vrot.slane %v829, %v918
    %v921 = vsel %vm159, %v915, 0
    %923 = vmatprep.subr.bf16.mxu0 0
    %924 = vmatpush1.bf16.msra.mxu0 %v839
    %925 = vmatprep.subr.bf16.mxu0 0
    %926 = vmatpush1.bf16.msra.mxu0 %v840
    %927 = vmatprep.subr.bf16.mxu0 0
    %928 = vmatpush1.bf16.msra.mxu0 0
    %929 = vmatprep.subr.bf16.mxu0 0
    %930 = vmatpush1.bf16.msra.mxu0 0
    %931 = vmatprep.subr.bf16.mxu0 0
    %932 = vmatpush1.bf16.msra.mxu0 0
    %933 = vmatprep.subr.bf16.mxu0 0
    %934 = vmatpush1.bf16.msra.mxu0 0
    %935 = vmatprep.subr.bf16.mxu0 0
    %936 = vmatpush1.bf16.msra.mxu0 0
    %937 = vmatprep.subr.bf16.mxu0 0
    %938 = vmatpush1.bf16.msra.mxu0 0
    %939 = vmatprep.subr.bf16.mxu0 0
    %940 = vmatpush1.bf16.msra.mxu0 0
    %941 = vmatprep.subr.bf16.mxu0 0
    %942 = vmatpush1.bf16.msra.mxu0 0
    %943 = vmatprep.subr.bf16.mxu0 0
    %944 = vmatpush1.bf16.msra.mxu0 0
    %945 = vmatprep.subr.bf16.mxu0 0
    %946 = vmatpush1.bf16.msra.mxu0 0
    %947 = vmatprep.subr.bf16.mxu0 0
    %948 = vmatpush1.bf16.msra.mxu0 0
    %949 = vmatprep.subr.bf16.mxu0 0
    %950 = vmatpush1.bf16.msra.mxu0 0
    %951 = vmatprep.subr.bf16.mxu0 0
    %952 = vmatpush1.bf16.msra.mxu0 0
    %953 = vmatprep.subr.bf16.mxu0 0
    %954 = vmatpush1.bf16.msra.mxu0 0
    %955 = vmatprep.mubr.bf16.mxu0 0
    %956 = vmatmul.mubr.bf16.gmra.mrb[0].mxu0 %v921
    %v957 = vpop.f32.mrb[0].mxu0
    %v958 = vadd.f32 %v919, %v957
    %v959 = vpop.f32.mrb[0].mxu0
    %v960 = vpop.f32.mrb[0].mxu0
    %v961 = vadd.f32 %v919, %v960
    %v962 = vpop.f32.mrb[0].mxu0
    %963 = vdwg.mxu0
    %v964 = vmul.f32 %v958, %v354
    %v965 = vmul.f32 %v961, %v356
    %v966 = vmul.f32 %v958, %v358
    %v967 = vmul.f32 %v961, %v360
    %v968 = vmul.f32 %v958, %v362
    %v969 = vmul.f32 %v961, %v364
    %v970 = vmul.f32 %v958, %v366
    %v971 = vmul.f32 %v961, %v368
    %v972 = vpack.c.bf16 %v965, %v964
    %v973 = vpack.c.bf16 %v967, %v966
    %v974 = vpack.c.bf16 %v969, %v968
    %v975 = vpack.c.bf16 %v971, %v970
    %v976 = vmul.f32 %v958, %v390
    %v977 = vmul.f32 %v961, %v392
    %v978 = vmul.f32 %v958, %v394
    %v979 = vmul.f32 %v961, %v396
    %v980 = vmul.f32 %v958, %v398
    %v981 = vmul.f32 %v961, %v400
    %v982 = vmul.f32 %v958, %v402
    %v983 = vmul.f32 %v961, %v404
    %v984 = vpack.c.bf16 %v977, %v976
    %v985 = vpack.c.bf16 %v979, %v978
    %v986 = vpack.c.bf16 %v981, %v980
    %v987 = vpack.c.bf16 %v983, %v982
    %v988 = vpack.c.bf16 %v961, %v958
    %993 = vrot.lane.b32.xlu0 %v972, 96
    %v994 = vpop.permute.xlu0 %993
    %995 = vrot.lane.b32.xlu0 %v973, 96
    %v996 = vpop.permute.xlu0 %995
    %997 = vrot.lane.b32.xlu0 %v974, 96
    %v998 = vpop.permute.xlu0 %997
    %999 = vrot.lane.b32.xlu0 %v975, 96
    %v1000 = vpop.permute.xlu0 %999
    %v1002 = vsel %vm159, %v988, 0
    %v1005 = vsel %vm159, %v994, 0
    %v1008 = vsel %vm159, %v996, 0
    %v1011 = vsel %vm159, %v998, 0
    %v1014 = vsel %vm159, %v1000, 0
    %1016 = vmatprep.subr.bf16.mxu0 0
    %1017 = vmatpush1.bf16.xpose.msra.mxu0 %v1005
    %1018 = vmatprep.subr.bf16.mxu0 0
    %1019 = vmatpush1.bf16.xpose.msra.mxu0 %v1008
    %1020 = vmatprep.subr.bf16.mxu0 0
    %1021 = vmatpush1.bf16.xpose.msra.mxu0 %v1011
    %1022 = vmatprep.subr.bf16.mxu0 0
    %1023 = vmatpush1.bf16.xpose.msra.mxu0 %v1014
    %1024 = vmatprep.subr.bf16.mxu0 0
    %1025 = vmatpush1.bf16.xpose.msra.mxu0 0
    %1026 = vmatprep.subr.bf16.mxu0 0
    %1027 = vmatpush1.bf16.xpose.msra.mxu0 0
    %1028 = vmatprep.subr.bf16.mxu0 0
    %1029 = vmatpush1.bf16.xpose.msra.mxu0 0
    %1030 = vmatprep.subr.bf16.mxu0 0
    %1031 = vmatpush1.bf16.xpose.msra.mxu0 0
    %1032 = vmatprep.subr.bf16.mxu0 0
    %1033 = vmatpush1.bf16.xpose.msra.mxu0 0
    %1034 = vmatprep.subr.bf16.mxu0 0
    %1035 = vmatpush1.bf16.xpose.msra.mxu0 0
    %1036 = vmatprep.subr.bf16.mxu0 0
    %1037 = vmatpush1.bf16.xpose.msra.mxu0 0
    %1038 = vmatprep.subr.bf16.mxu0 0
    %1039 = vmatpush1.bf16.xpose.msra.mxu0 0
    %1040 = vmatprep.subr.bf16.mxu0 0
    %1041 = vmatpush1.bf16.xpose.msra.mxu0 0
    %1042 = vmatprep.subr.bf16.mxu0 0
    %1043 = vmatpush1.bf16.xpose.msra.mxu0 0
    %1044 = vmatprep.subr.bf16.mxu0 0
    %1045 = vmatpush1.bf16.xpose.msra.mxu0 0
    %1046 = vmatprep.subr.bf16.mxu0 0
    %1047 = vmatpush1.bf16.xpose.msra.mxu0 0
    %1048 = vmatprep.mubr.bf16.mxu0 0
    %1049 = vmatmul.mubr.bf16.gmra.mrb[0].mxu0 %v1002
    %v1050 = vpop.f32.mrb[0].mxu0
    %v1051 = vadd.f32 0.0, %v1050
    %v1052 = vpop.f32.mrb[0].mxu0
    %v1053 = vpop.f32.mrb[0].mxu0
    %v1054 = vadd.f32 0.0, %v1053
    %v1055 = vpop.f32.mrb[0].mxu0
    %1056 = vdwg.mxu0
    %v1057 = vmul.f32 %v1051, 0.35355338
    %v1058 = vmul.f32 %v1054, 0.35355338
    %v1059 = vadd.f32 %v1057, %v163
    %v1060 = vadd.f32 %v1058, %v164
    %v1061 = vsel %vm498, %v1059, -inf
    %1062 = vmax.xlane.f32.xlu0 %v1061
    %v1063 = vpop.xlane.xlu0 %1062
    %v1064 = vsel %vm498, %v1060, -inf
    %1065 = vmax.xlane.f32.xlu0 %v1064
    %v1066 = vpop.xlane.xlu0 %1065
    %v1067 = vsub.f32 %v1059, %v1063
    %v1068 = vsub.f32 %v1060, %v1066
    %v1069 = vmul.f32 %v1067, 1.442695
    %v1070 = vpow.pop %v1069
    %v1071 = vmul.f32 %v1068, 1.442695
    %v1072 = vpow.pop %v1071
    %v1073 = vpack.c.bf16 %v1072, %v1070
    %1078 = vrot.lane.b32.xlu0 %v984, 64
    %v1079 = vpop.permute.xlu0 %1078
    %1080 = vrot.lane.b32.xlu0 %v985, 64
    %v1081 = vpop.permute.xlu0 %1080
    %1082 = vrot.lane.b32.xlu0 %v986, 64
    %v1083 = vpop.permute.xlu0 %1082
    %1084 = vrot.lane.b32.xlu0 %v987, 64
    %v1085 = vpop.permute.xlu0 %1084
    %v1091 = vsel %vm498, %v1073, 0
    %1093 = vmatprep.subr.bf16.mxu0 0
    %1094 = vmatpush1.bf16.msra.mxu0 %v1079
    %1095 = vmatprep.subr.bf16.mxu0 0
    %1096 = vmatpush1.bf16.msra.mxu0 %v1081
    %1097 = vmatprep.subr.bf16.mxu0 0
    %1098 = vmatpush1.bf16.msra.mxu0 %v1083
    %1099 = vmatprep.subr.bf16.mxu0 0
    %1100 = vmatpush1.bf16.msra.mxu0 %v1085
    %1101 = vmatprep.subr.bf16.mxu0 0
    %1102 = vmatpush1.bf16.msra.mxu0 0
    %1103 = vmatprep.subr.bf16.mxu0 0
    %1104 = vmatpush1.bf16.msra.mxu0 0
    %1105 = vmatprep.subr.bf16.mxu0 0
    %1106 = vmatpush1.bf16.msra.mxu0 0
    %1107 = vmatprep.subr.bf16.mxu0 0
    %1108 = vmatpush1.bf16.msra.mxu0 0
    %1109 = vmatprep.subr.bf16.mxu0 0
    %1110 = vmatpush1.bf16.msra.mxu0 0
    %1111 = vmatprep.subr.bf16.mxu0 0
    %1112 = vmatpush1.bf16.msra.mxu0 0
    %1113 = vmatprep.subr.bf16.mxu0 0
    %1114 = vmatpush1.bf16.msra.mxu0 0
    %1115 = vmatprep.subr.bf16.mxu0 0
    %1116 = vmatpush1.bf16.msra.mxu0 0
    %1117 = vmatprep.subr.bf16.mxu0 0
    %1118 = vmatpush1.bf16.msra.mxu0 0
    %1119 = vmatprep.subr.bf16.mxu0 0
    %1120 = vmatpush1.bf16.msra.mxu0 0
    %1121 = vmatprep.subr.bf16.mxu0 0
    %1122 = vmatpush1.bf16.msra.mxu0 0
    %1123 = vmatprep.subr.bf16.mxu0 0
    %1124 = vmatpush1.bf16.msra.mxu0 0
    %1125 = vmatprep.mubr.bf16.mxu0 0
    %1126 = vmatmul.mubr.bf16.gmra.mrb[0].mxu0 %v1091
    %v1127 = vpop.f32.mrb[0].mxu0
    %v1128 = vadd.f32 0.0, %v1127
    %v1129 = vpop.f32.mrb[0].mxu0
    %v1130 = vpop.f32.mrb[0].mxu0
    %v1131 = vadd.f32 0.0, %v1130
    %v1132 = vpop.f32.mrb[0].mxu0
    %1133 = vdwg.mxu0
    %1134 = vmatprep.subr.bf16.mxu0 0
    %1135 = vmatpush1.bf16.msra.mxu0 %v203
    %1136 = vmatprep.subr.bf16.mxu0 0
    %1137 = vmatpush1.bf16.msra.mxu0 %v204
    %1138 = vmatprep.subr.bf16.mxu0 0
    %1139 = vmatpush1.bf16.msra.mxu0 %v205
    %1140 = vmatprep.subr.bf16.mxu0 0
    %1141 = vmatpush1.bf16.msra.mxu0 %v206
    %1142 = vmatprep.subr.bf16.mxu0 0
    %1143 = vmatpush1.bf16.msra.mxu0 0
    %1144 = vmatprep.subr.bf16.mxu0 0
    %1145 = vmatpush1.bf16.msra.mxu0 0
    %1146 = vmatprep.subr.bf16.mxu0 0
    %1147 = vmatpush1.bf16.msra.mxu0 0
    %1148 = vmatprep.subr.bf16.mxu0 0
    %1149 = vmatpush1.bf16.msra.mxu0 0
    %1150 = vmatprep.subr.bf16.mxu0 0
    %1151 = vmatpush1.bf16.msra.mxu0 0
    %1152 = vmatprep.subr.bf16.mxu0 0
    %1153 = vmatpush1.bf16.msra.mxu0 0
    %1154 = vmatprep.subr.bf16.mxu0 0
    %1155 = vmatpush1.bf16.msra.mxu0 0
    %1156 = vmatprep.subr.bf16.mxu0 0
    %1157 = vmatpush1.bf16.msra.mxu0 0
    %1158 = vmatprep.subr.bf16.mxu0 0
    %1159 = vmatpush1.bf16.msra.mxu0 0
    %1160 = vmatprep.subr.bf16.mxu0 0
    %1161 = vmatpush1.bf16.msra.mxu0 0
    %1162 = vmatprep.subr.bf16.mxu0 0
    %1163 = vmatpush1.bf16.msra.mxu0 0
    %1164 = vmatprep.subr.bf16.mxu0 0
    %1165 = vmatpush1.bf16.msra.mxu0 0
    %1166 = vmatprep.mubr.bf16.mxu0 0
    %1167 = vmatmul.mubr.bf16.gmra.mrb[0].mxu0 %v1091
    %v1168 = vpop.f32.mrb[0].mxu0
    %v1169 = vadd.f32 0.0, %v1168
    %v1170 = vpop.f32.mrb[0].mxu0
    %v1171 = vpop.f32.mrb[0].mxu0
    %v1172 = vadd.f32 0.0, %v1171
    %v1173 = vpop.f32.mrb[0].mxu0
    %1174 = vdwg.mxu0
    %v1175 = vmax.f32 %v1169, 1e-30
    %v1176 = vmax.f32 %v1172, 1e-30
    %v1177 = vrcp.pop %v1175
    %v1178 = vrcp.pop %v1176
    %v1179 = vmul.f32 %v1128, %v1177
    %v1180 = vmul.f32 %v1131, %v1178
    %v1181 = vpack.c.bf16 %v1180, %v1179
    %v1183 = vsel %vm159, %v1181, 0
    %1185 = vmatprep.subr.bf16.mxu0 0
    %1186 = vmatpush1.bf16.msra.mxu0 %v845
    %1187 = vmatprep.subr.bf16.mxu0 0
    %1188 = vmatpush1.bf16.msra.mxu0 %v846
    %1189 = vmatprep.subr.bf16.mxu0 0
    %1190 = vmatpush1.bf16.msra.mxu0 0
    %1191 = vmatprep.subr.bf16.mxu0 0
    %1192 = vmatpush1.bf16.msra.mxu0 0
    %1193 = vmatprep.subr.bf16.mxu0 0
    %1194 = vmatpush1.bf16.msra.mxu0 0
    %1195 = vmatprep.subr.bf16.mxu0 0
    %1196 = vmatpush1.bf16.msra.mxu0 0
    %1197 = vmatprep.subr.bf16.mxu0 0
    %1198 = vmatpush1.bf16.msra.mxu0 0
    %1199 = vmatprep.subr.bf16.mxu0 0
    %1200 = vmatpush1.bf16.msra.mxu0 0
    %1201 = vmatprep.subr.bf16.mxu0 0
    %1202 = vmatpush1.bf16.msra.mxu0 0
    %1203 = vmatprep.subr.bf16.mxu0 0
    %1204 = vmatpush1.bf16.msra.mxu0 0
    %1205 = vmatprep.subr.bf16.mxu0 0
    %1206 = vmatpush1.bf16.msra.mxu0 0
    %1207 = vmatprep.subr.bf16.mxu0 0
    %1208 = vmatpush1.bf16.msra.mxu0 0
    %1209 = vmatprep.subr.bf16.mxu0 0
    %1210 = vmatpush1.bf16.msra.mxu0 0
    %1211 = vmatprep.subr.bf16.mxu0 0
    %1212 = vmatpush1.bf16.msra.mxu0 0
    %1213 = vmatprep.subr.bf16.mxu0 0
    %1214 = vmatpush1.bf16.msra.mxu0 0
    %1215 = vmatprep.subr.bf16.mxu0 0
    %1216 = vmatpush1.bf16.msra.mxu0 0
    %1217 = vmatprep.mubr.bf16.mxu0 0
    %1218 = vmatmul.mubr.bf16.gmra.mrb[0].mxu0 %v1183
    %v1219 = vpop.f32.mrb[0].mxu0
    %v1220 = vadd.f32 0.0, %v1219
    %v1221 = vpop.f32.mrb[0].mxu0
    %v1222 = vpop.f32.mrb[0].mxu0
    %v1223 = vadd.f32 0.0, %v1222
    %v1224 = vpop.f32.mrb[0].mxu0
    %1225 = vdwg.mxu0
    %v1226 = vadd.f32 %v825, %v1220
    %v1227 = vadd.f32 %v826, %v1223
    %v1228 = vlaneseq
    %v1229 = vshrl.u32 %v1228, 7
    %v1230 = vsub.s32 0, %v1229
    %v1231 = vrot.slane %v830, %v1230
    %v1232 = vadd.f32 %v1226, %v1231
    %v1233 = vadd.f32 %v1227, %v1231
    %v1234 = vsel %vm159, %v1232, 0.0
    %1235 = vadd.xlane.f32.xlu0 %v1234
    %v1236 = vpop.xlane.xlu0 %1235
    %v1237 = vsel %vm159, %v1233, 0.0
    %1238 = vadd.xlane.f32.xlu0 %v1237
    %v1239 = vpop.xlane.xlu0 %1238
    %v1240 = vmul.f32 %v1236, %v263
    %v1241 = vmul.f32 %v1239, %v263
    %v1242 = vsub.f32 %v1232, %v1240
    %v1243 = vsub.f32 %v1233, %v1241
    %v1244 = vmul.f32 %v1242, %v1242
    %v1245 = vmul.f32 %v1243, %v1243
    %v1246 = vsel %vm159, %v1244, 0.0
    %1247 = vadd.xlane.f32.xlu0 %v1246
    %v1248 = vpop.xlane.xlu0 %1247
    %v1249 = vsel %vm159, %v1245, 0.0
    %1250 = vadd.xlane.f32.xlu0 %v1249
    %v1251 = vpop.xlane.xlu0 %1250
    %v1252 = vmul.f32 %v1248, %v263
    %v1253 = vmul.f32 %v1251, %v263
    %v1254 = vadd.f32 %v1252, 1e-05
    %v1255 = vadd.f32 %v1253, 1e-05
    %v1256 = vrsqrt.pop %v1254
    %v1257 = vrsqrt.pop %v1255
    %v1258 = vmul.f32 %v1242, %v1256
    %v1259 = vmul.f32 %v1243, %v1257
    %v1260 = vlaneseq
    %v1261 = vshrl.u32 %v1260, 7
    %v1262 = vsub.s32 0, %v1261
    %v1263 = vrot.slane %v831, %v1262
    %v1264 = vmul.f32 %v1258, %v1263
    %v1265 = vmul.f32 %v1259, %v1263
    %v1266 = vlaneseq
    %v1267 = vshrl.u32 %v1266, 7
    %v1268 = vsub.s32 0, %v1267
    %v1269 = vrot.slane %v832, %v1268
    %v1270 = vadd.f32 %v1264, %v1269
    %v1271 = vadd.f32 %v1265, %v1269
    %v1272 = vpack.c.bf16 %v1271, %v1270
    %v1273 = vlaneseq
    %v1274 = vshrl.u32 %v1273, 7
    %v1275 = vsub.s32 0, %v1274
    %v1276 = vrot.slane %v833, %v1275
    %v1278 = vsel %vm159, %v1272, 0
    %1280 = vmatprep.subr.bf16.mxu0 0
    %1281 = vmatpush1.bf16.msra.mxu0 %v851
    %1282 = vmatprep.subr.bf16.mxu0 0
    %1283 = vmatpush1.bf16.msra.mxu0 %v852
    %1284 = vmatprep.subr.bf16.mxu0 0
    %1285 = vmatpush1.bf16.msra.mxu0 0
    %1286 = vmatprep.subr.bf16.mxu0 0
    %1287 = vmatpush1.bf16.msra.mxu0 0
    %1288 = vmatprep.subr.bf16.mxu0 0
    %1289 = vmatpush1.bf16.msra.mxu0 0
    %1290 = vmatprep.subr.bf16.mxu0 0
    %1291 = vmatpush1.bf16.msra.mxu0 0
    %1292 = vmatprep.subr.bf16.mxu0 0
    %1293 = vmatpush1.bf16.msra.mxu0 0
    %1294 = vmatprep.subr.bf16.mxu0 0
    %1295 = vmatpush1.bf16.msra.mxu0 0
    %1296 = vmatprep.subr.bf16.mxu0 0
    %1297 = vmatpush1.bf16.msra.mxu0 0
    %1298 = vmatprep.subr.bf16.mxu0 0
    %1299 = vmatpush1.bf16.msra.mxu0 0
    %1300 = vmatprep.subr.bf16.mxu0 0
    %1301 = vmatpush1.bf16.msra.mxu0 0
    %1302 = vmatprep.subr.bf16.mxu0 0
    %1303 = vmatpush1.bf16.msra.mxu0 0
    %1304 = vmatprep.subr.bf16.mxu0 0
    %1305 = vmatpush1.bf16.msra.mxu0 0
    %1306 = vmatprep.subr.bf16.mxu0 0
    %1307 = vmatpush1.bf16.msra.mxu0 0
    %1308 = vmatprep.subr.bf16.mxu0 0
    %1309 = vmatpush1.bf16.msra.mxu0 0
    %1310 = vmatprep.subr.bf16.mxu0 0
    %1311 = vmatpush1.bf16.msra.mxu0 0
    %1312 = vmatprep.mubr.bf16.mxu0 0
    %1313 = vmatmul.mubr.bf16.gmra.mrb[0].mxu0 %v1278
    %v1314 = vpop.f32.mrb[0].mxu0
    %v1315 = vadd.f32 %v1276, %v1314
    %v1316 = vpop.f32.mrb[0].mxu0
    %v1317 = vpop.f32.mrb[0].mxu0
    %v1318 = vadd.f32 %v1276, %v1317
    %v1319 = vpop.f32.mrb[0].mxu0
    %1320 = vdwg.mxu0
    %v1321 = vmul.f32 %v1315, 0.5
    %v1322 = vmul.f32 %v1318, 0.5
    %v1323 = vmul.f32 %v1315, 0.044715
    %v1324 = vmul.f32 %v1318, 0.044715
    %v1325 = vmul.f32 %v1323, %v1315
    %v1326 = vmul.f32 %v1324, %v1318
    %v1327 = vmul.f32 %v1325, %v1315
    %v1328 = vmul.f32 %v1326, %v1318
    %v1329 = vadd.f32 %v1315, %v1327
    %v1330 = vadd.f32 %v1318, %v1328
    %v1331 = vmul.f32 %v1329, 0.7978846
    %v1332 = vmul.f32 %v1330, 0.7978846
    %v1333 = vtanh.pop %v1331
    %v1334 = vtanh.pop %v1332
    %v1335 = vadd.f32 %v1333, 1.0
    %v1336 = vadd.f32 %v1334, 1.0
    %v1337 = vmul.f32 %v1321, %v1335
    %v1338 = vmul.f32 %v1322, %v1336
    %v1339 = vpack.c.bf16 %v1338, %v1337
    %1340 = vmatprep.subr.bf16.mxu0 0
    %1341 = vmatpush1.bf16.msra.mxu0 %v869
    %1342 = vmatprep.subr.bf16.mxu0 0
    %1343 = vmatpush1.bf16.msra.mxu0 %v870
    %1344 = vmatprep.subr.bf16.mxu0 0
    %1345 = vmatpush1.bf16.msra.mxu0 %v871
    %1346 = vmatprep.subr.bf16.mxu0 0
    %1347 = vmatpush1.bf16.msra.mxu0 %v872
    %1348 = vmatprep.subr.bf16.mxu0 0
    %1349 = vmatpush1.bf16.msra.mxu0 %v873
    %1350 = vmatprep.subr.bf16.mxu0 0
    %1351 = vmatpush1.bf16.msra.mxu0 %v874
    %1352 = vmatprep.subr.bf16.mxu0 0
    %1353 = vmatpush1.bf16.msra.mxu0 %v875
    %1354 = vmatprep.subr.bf16.mxu0 0
    %1355 = vmatpush1.bf16.msra.mxu0 %v876
    %1356 = vmatprep.subr.bf16.mxu0 0
    %1357 = vmatpush1.bf16.msra.mxu0 0
    %1358 = vmatprep.subr.bf16.mxu0 0
    %1359 = vmatpush1.bf16.msra.mxu0 0
    %1360 = vmatprep.subr.bf16.mxu0 0
    %1361 = vmatpush1.bf16.msra.mxu0 0
    %1362 = vmatprep.subr.bf16.mxu0 0
    %1363 = vmatpush1.bf16.msra.mxu0 0
    %1364 = vmatprep.subr.bf16.mxu0 0
    %1365 = vmatpush1.bf16.msra.mxu0 0
    %1366 = vmatprep.subr.bf16.mxu0 0
    %1367 = vmatpush1.bf16.msra.mxu0 0
    %1368 = vmatprep.subr.bf16.mxu0 0
    %1369 = vmatpush1.bf16.msra.mxu0 0
    %1370 = vmatprep.subr.bf16.mxu0 0
    %1371 = vmatpush1.bf16.msra.mxu0 0
    %1372 = vmatprep.mubr.bf16.mxu0 0
    %1373 = vmatmul.mubr.bf16.gmra.mrb[0].mxu0 %v1339
    %v1374 = vpop.f32.mrb[0].mxu0
    %v1375 = vadd.f32 0.0, %v1374
    %v1376 = vpop.f32.mrb[0].mxu0
    %v1377 = vpop.f32.mrb[0].mxu0
    %v1378 = vadd.f32 0.0, %v1377
    %v1379 = vpop.f32.mrb[0].mxu0
    %1380 = vdwg.mxu0
    %v1381 = vadd.f32 %v1232, %v1375
    %v1382 = vadd.f32 %v1233, %v1378
    %v1383 = vlaneseq
    %v1384 = vshrl.u32 %v1383, 7
    %v1385 = vsub.s32 0, %v1384
    %v1386 = vrot.slane %v834, %v1385
    %v1387 = vadd.f32 %v1381, %v1386
    %v1388 = vadd.f32 %v1382, %v1386
    %v1389 = vld [vmem:[#allocation2 + $0x88] sm:$0x1]
    %v1390 = vld [vmem:[#allocation2 + $0x89] sm:$0x1]
    %v1391 = vsel %vm159, %v1387, 0.0
    %1392 = vadd.xlane.f32.xlu0 %v1391
    %v1393 = vpop.xlane.xlu0 %1392
    %v1394 = vsel %vm159, %v1388, 0.0
    %1395 = vadd.xlane.f32.xlu0 %v1394
    %v1396 = vpop.xlane.xlu0 %1395
    %v1397 = vmul.f32 %v1393, %v263
    %v1398 = vmul.f32 %v1396, %v263
    %v1399 = vsub.f32 %v1387, %v1397
    %v1400 = vsub.f32 %v1388, %v1398
    %v1401 = vmul.f32 %v1399, %v1399
    %v1402 = vmul.f32 %v1400, %v1400
    %v1403 = vsel %vm159, %v1401, 0.0
    %1404 = vadd.xlane.f32.xlu0 %v1403
    %v1405 = vpop.xlane.xlu0 %1404
    %v1406 = vsel %vm159, %v1402, 0.0
    %1407 = vadd.xlane.f32.xlu0 %v1406
    %v1408 = vpop.xlane.xlu0 %1407
    %v1409 = vmul.f32 %v1405, %v263
    %v1410 = vmul.f32 %v1408, %v263
    %v1411 = vadd.f32 %v1409, 1e-05
    %v1412 = vadd.f32 %v1410, 1e-05
    %v1413 = vrsqrt.pop %v1411
    %v1414 = vrsqrt.pop %v1412
    %v1415 = vmul.f32 %v1399, %v1413
    %v1416 = vmul.f32 %v1400, %v1414
    %v1417 = vlaneseq
    %v1418 = vshrl.u32 %v1417, 7
    %v1419 = vsub.s32 0, %v1418
    %v1420 = vrot.slane %v1389, %v1419
    %v1421 = vmul.f32 %v1415, %v1420
    %v1422 = vmul.f32 %v1416, %v1420
    %v1423 = vlaneseq
    %v1424 = vshrl.u32 %v1423, 7
    %v1425 = vsub.s32 0, %v1424
    %v1426 = vrot.slane %v1390, %v1425
    %v1427 = vadd.f32 %v1421, %v1426
    %v1428 = vadd.f32 %v1422, %v1426
    %v1429 = vpack.c.bf16 %v1428, %v1427
    %v1431 = vsel %vm159, %v1429, 0
    %v1434 = vsel %vm159, %v48, 0
    %v1437 = vsel %vm159, %v49, 0
    %v1440 = vsel %vm159, %v50, 0
    %v1443 = vsel %vm159, %v51, 0
    %v1446 = vsel %vm159, %v52, 0
    %v1449 = vsel %vm159, %v53, 0
    %v1452 = vsel %vm159, %v54, 0
    %v1455 = vsel %vm159, %v55, 0
    %1457 = vmatprep.subr.bf16.mxu0 0
    %1458 = vmatpush1.bf16.xpose.msra.mxu0 %v1434
    %1459 = vmatprep.subr.bf16.mxu0 0
    %1460 = vmatpush1.bf16.xpose.msra.mxu0 %v1437
    %1461 = vmatprep.subr.bf16.mxu0 0
    %1462 = vmatpush1.bf16.xpose.msra.mxu0 %v1440
    %1463 = vmatprep.subr.bf16.mxu0 0
    %1464 = vmatpush1.bf16.xpose.msra.mxu0 %v1443
    %1465 = vmatprep.subr.bf16.mxu0 0
    %1466 = vmatpush1.bf16.xpose.msra.mxu0 %v1446
    %1467 = vmatprep.subr.bf16.mxu0 0
    %1468 = vmatpush1.bf16.xpose.msra.mxu0 %v1449
    %1469 = vmatprep.subr.bf16.mxu0 0
    %1470 = vmatpush1.bf16.xpose.msra.mxu0 %v1452
    %1471 = vmatprep.subr.bf16.mxu0 0
    %1472 = vmatpush1.bf16.xpose.msra.mxu0 %v1455
    %1473 = vmatprep.subr.bf16.mxu0 0
    %1474 = vmatpush1.bf16.xpose.msra.mxu0 0
    %1475 = vmatprep.subr.bf16.mxu0 0
    %1476 = vmatpush1.bf16.xpose.msra.mxu0 0
    %1477 = vmatprep.subr.bf16.mxu0 0
    %1478 = vmatpush1.bf16.xpose.msra.mxu0 0
    %1479 = vmatprep.subr.bf16.mxu0 0
    %1480 = vmatpush1.bf16.xpose.msra.mxu0 0
    %1481 = vmatprep.subr.bf16.mxu0 0
    %1482 = vmatpush1.bf16.xpose.msra.mxu0 0
    %1483 = vmatprep.subr.bf16.mxu0 0
    %1484 = vmatpush1.bf16.xpose.msra.mxu0 0
    %1485 = vmatprep.subr.bf16.mxu0 0
    %1486 = vmatpush1.bf16.xpose.msra.mxu0 0
    %1487 = vmatprep.subr.bf16.mxu0 0
    %1488 = vmatpush1.bf16.xpose.msra.mxu0 0
    %1489 = vmatprep.mubr.bf16.mxu0 0
    %1490 = vmatmul.mubr.bf16.gmra.mrb[0].mxu0 %v1431
    %v1491 = vpop.f32.mrb[0].mxu0
    %v1492 = vadd.f32 0.0, %v1491
    %v1493 = vpop.f32.mrb[0].mxu0
    %v1494 = vpop.f32.mrb[0].mxu0
    %v1495 = vadd.f32 0.0, %v1494
    %v1496 = vpop.f32.mrb[0].mxu0
    %1497 = vdwg.mxu0
    %1498 = vst [vmem:[%s2] sm:$0xff] %v1492
    %1499 = vst [vmem:[%s2 + $0x8] sm:$0xff] %v1495
    %vm1500 = vcmp.ge.s32.totalorder %v58, 64
    %v1501 = vsel %vm1500, -1e+09, %v1492
    %v1502 = vsel %vm1500, -1e+09, %v1495
    %1503 = vmax.xlane.f32.xlu0 %v1501
    %v1504 = vpop.xlane.xlu0 %1503
    %1505 = vmax.xlane.f32.xlu0 %v1502
    %v1506 = vpop.xlane.xlu0 %1505
    %v1507 = vsub.f32 %v1501, %v1504
    %v1508 = vsub.f32 %v1502, %v1506
    %v1509 = vmul.f32 %v1507, 1.442695
    %v1510 = vpow.pop %v1509
    %v1511 = vmul.f32 %v1508, 1.442695
    %v1512 = vpow.pop %v1511
    %1513 = vadd.xlane.f32.xlu0 %v1510
    %v1514 = vpop.xlane.xlu0 %1513
    %1515 = vadd.xlane.f32.xlu0 %v1512
    %v1516 = vpop.xlane.xlu0 %1515
    %v1517 = vlog2.pop %v1514
    %v1518 = vmul.f32 %v1517, 0.6931472
    %v1519 = vlog2.pop %v1516
    %v1520 = vmul.f32 %v1519, 0.6931472
    %v1521 = vadd.f32 %v1518, %v1504
    %v1522 = vadd.f32 %v1520, %v1506
    %1523 = vset.pattern.permute.xlu0 1
    %1524 = vperm.xlu0 %1523, %v29
    %v1525 = vpop.permute.xlu0 %1524
    %1526 = vset.pattern.permute.xlu0 1
    %1527 = vperm.xlu0 %1526, %v30
    %v1528 = vpop.permute.xlu0 %1527
    %vm1529 = vcmp.eq.s32.totalorder %v58, %v1525
    %vm1530 = vcmp.eq.s32.totalorder %v58, %v1528
    %v1531 = vsel %vm1529, 1, 0
    %v1532 = vsel %vm1530, 1, 0
    %v1533 = vcvt.s32.f32 %v1531
    %v1534 = vcvt.s32.f32 %v1532
    %v1535 = vmul.f32 %v1492, %v1533
    %v1536 = vmul.f32 %v1495, %v1534
    %1537 = vadd.xlane.f32.xlu0 %v1535
    %v1538 = vpop.xlane.xlu0 %1537
    %1539 = vadd.xlane.f32.xlu0 %v1536
    %v1540 = vpop.xlane.xlu0 %1539
    %vm1541 = vcmp.ne.s32.totalorder %v29, 4294967196
    %vm1542 = vcmp.ne.s32.totalorder %v30, 4294967196
    %v1543 = vsel %vm1541, 1, 0
    %v1544 = vsel %vm1542, 1, 0
    %v1545 = vcvt.s32.f32 %v1543
    %v1546 = vcvt.s32.f32 %v1544
    %v1547 = vsub.f32 %v1521, %v1538
    %v1548 = vsub.f32 %v1522, %v1540
    %v1549 = vmul.f32 %v1547, %v1545
    %v1550 = vmul.f32 %v1548, %v1546
    %vm1551 = vcmask 15368
    %v1552 = vsel %vm1551, %v1549, 0.0
    %v1553 = vsel %vm1551, %v1550, 0.0
    %v1554 = vadd.f32 %v1552, %v1553
    %v1555 = vrot.slane %v1554, 4
    %v1556 = vadd.f32 %v1554, %v1555
    %v1557 = vrot.slane %v1556, 2
    %v1558 = vadd.f32 %v1556, %v1557
    %v1559 = vrot.slane %v1558, 1
    %v1560 = vadd.f32 %v1558, %v1559
    %v1561 = vsel %vm1551, %v1545, 0.0
    %v1562 = vsel %vm1551, %v1546, 0.0
    %v1563 = vadd.f32 %v1561, %v1562
    %v1564 = vrot.slane %v1563, 4
    %v1565 = vadd.f32 %v1563, %v1564
    %v1566 = vrot.slane %v1565, 2
    %v1567 = vadd.f32 %v1565, %v1566
    %v1568 = vrot.slane %v1567, 1
    %v1569 = vadd.f32 %v1567, %v1568
    %v1570 = vrcp.pop %v1569
    %v1571 = vmul.f32 %v1560, %v1570
    %1573 = vrot.lane.b32.xlu0 %v1571, 127
    %v1574 = vpop.permute.xlu0 %1573
    %vm1576 = vcmask 0
    %1577 = vst.msk [vmem:[#allocation5] sm:$0x1] %vm1576, %v1574
    // Predicated region
    $region14: #{model_llm_forward.1} parent=1 // pred_check
      _
    $region15: #{model_llm_forward.1} parent=1 // pred_check_branch
      %1579 = sbr.rel (0) target = $region17
    $region16: #{model_llm_forward.1} parent=1 // pred_region
      _
    $region17: #{model_llm_forward.1} parent=1 // pred_fallthru
      _
    // Predicated region
    $region18: #{model_llm_forward.1} parent=1 // pred_check
      _
    $region19: #{model_llm_forward.1} parent=1 // pred_check_branch
      %1581 = sbr.rel (0) target = $region21
    $region20: #{model_llm_forward.1} parent=1 // pred_region
      %s1583 = ssub.s32 16, 16
      %1584 = vsyncadd [#allocation4], %s1583
      %s1586 = sshll.u32 [#allocation5], 4
      %s1587 = int_to_ptr.vmem [resolvable:$true] %s1586
      %1589 = dma.vmem_to_hbm [thread:$0]  %s1587, 16, %s3, [#allocation4]
    $region21: #{model_llm_forward.1} parent=1 // pred_fallthru
      _
    // Predicated region
    $region22: #{model_llm_forward.1} parent=1 // pred_check
      _
    $region23: #{model_llm_forward.1} parent=1 // pred_check_branch
      %1591 = sbr.rel (0) target = $region25
    $region24: #{model_llm_forward.1} parent=1 // pred_region
      _
    $region25: #{model_llm_forward.1} parent=1 // pred_fallthru
      _
    // Predicated region
    $region26: #{model_llm_forward.1} parent=1 // pred_check
      _
    $region27: #{model_llm_forward.1} parent=1 // pred_check_branch
      %1593 = sbr.rel (0) target = $region29
    $region28: #{model_llm_forward.1} parent=1 // pred_region
      %1594 = dma.done [#allocation4], 16
    $region29: #{model_llm_forward.1} parent=1 // pred_fallthru
      _
    %1595 = vsyncpa [#allocation3], 1
    %1596 = vsyncpa [#allocation4], 1

</llo_original>
